<compile_context>
chip_gen: v7x
topology: tpu7x:2x2x1
jax: 0.10.0
libtpu: 0.0.40
codegen_flags: <defaults>
</compile_context>

<pallas_src>
import functools

import jax
import jax.numpy as jnp
from jax.experimental import pallas as pl
from jax.experimental.pallas import tpu as pltpu


def _round_up(x, m):
    return ((x + m - 1) // m) * m


def _vmem_capacity_bytes():
    """Per-core VMEM capacity (v5e/v6e 128 MiB, v7x 64 MiB/TC)."""
    try:
        cap = getattr(pltpu.get_tpu_info(), "vmem_capacity_bytes", None)
        if cap:
            return int(cap)
    except Exception:
        pass
    return 64 << 20  # conservative default (v7x-class per-core VMEM)


def _num_tensorcores():
    """'parallel' grid axes are sharded across TCs; v7x has 2 TCs per chip."""
    try:
        kind = jax.devices()[0].device_kind.lower()
        if "v7" in kind:
            return 2
    except Exception:
        pass
    return 1


def _supports_buffered():
    """Feature-detect BlockSpec(pipeline_mode=pl.Buffered(...)) support."""
    try:
        pl.BlockSpec((8, 128), lambda i: (0, 0), pipeline_mode=pl.Buffered(1))
        return True
    except Exception:
        return False


def _mlp_kernel(x_ref, *refs, num_layers, mxu_dtype):
    """refs = (w1, b1, ..., wL, bL, o_ref). One batch tile per grid step."""
    o_ref = refs[-1]
    param_refs = refs[:-1]

    h = x_ref[...]
    if h.dtype != mxu_dtype:
        h = h.astype(mxu_dtype)                 # bf16 MXU operand

    acc = None
    for layer in range(num_layers):
        w_ref = param_refs[2 * layer]
        b_ref = param_refs[2 * layer + 1]
        acc = jnp.dot(h, w_ref[...], preferred_element_type=jnp.float32)
        acc = acc + b_ref[...]                  # bias add in f32 (broadcasts over batch tile)
        if layer != num_layers - 1:
            acc = jnp.maximum(acc, 0.0)         # ReLU on hidden layers only (f32 on VPU)
            h = acc.astype(mxu_dtype)           # next-layer MXU operand
    o_ref[...] = acc.astype(o_ref.dtype)


def mlp_forward(x, weights, biases, *, batch_tile=None, mxu_dtype=jnp.bfloat16,
                out_dtype=None):
    """Run the fused MLP Pallas kernel.

    x       : [B, dims[0]]  (f32 or bf16; bf16 halves streamed input bytes)
    weights : list of [dims[i], dims[i+1]]  (already transposed vs PyTorch)
    biases  : list of [1, dims[i+1]] (or [dims[i+1]])
    """
    assert len(weights) == len(biases)
    num_layers = len(weights)
    B, d_in = x.shape
    dims = [d_in] + [int(w.shape[1]) for w in weights]
    for i, w in enumerate(weights):
        assert int(w.shape[0]) == dims[i], "weight chain mismatch"
    d_out = dims[-1]
    out_dtype = x.dtype if out_dtype is None else out_dtype

    # Hidden widths padded to a multiple of 128: they are re-used as MXU
    # operands for the next layer (lane-dense loads).  The final output width
    # stays UNPADDED -- it is never an MXU operand, and padding it to 128 would
    # multiply output HBM bytes and force a post-kernel slice pass.
    # Zero padding preserves semantics exactly (padded weight rows = 0,
    # padded bias = 0, ReLU(0) = 0).
    pdims = [d_in] + [_round_up(d, 128) for d in dims[1:-1]] + [d_out]

    mxu_item = jnp.dtype(mxu_dtype).itemsize
    p_weights, p_biases = [], []
    for i, (w, b) in enumerate(zip(weights, biases)):
        wi, wo = dims[i], dims[i + 1]
        pi, po = pdims[i], pdims[i + 1]
        w_p = jnp.zeros((pi, po), mxu_dtype).at[:wi, :wo].set(w.astype(mxu_dtype))
        b_p = jnp.zeros((1, po), jnp.float32).at[:, :wo].set(
            jnp.asarray(b, jnp.float32).reshape(1, wo))
        p_weights.append(w_p)
        p_biases.append(b_p)
    flat_params = [p for wb in zip(p_weights, p_biases) for p in wb]

    param_bytes = (sum(w.size * mxu_item for w in p_weights)
                   + sum(b.size * 4 for b in p_biases))
    x_item = jnp.dtype(x.dtype).itemsize
    out_item = jnp.dtype(out_dtype).itemsize
    max_width_p = max(pdims[1:])

    vmem_capacity = _vmem_capacity_bytes()
    vmem_budget = int(vmem_capacity * 0.6)       # tile-picking budget (headroom left)
    num_tc = _num_tensorcores()

    # Streamed x+out HBM bytes.  When tiny, each extra grid step (~0.35 us)
    # is pure overhead with nothing to hide behind compute -> fewer steps.
    io_bytes = B * d_in * x_item + B * d_out * out_item
    tiny_io = io_bytes <= (2 << 20)

    def vmem_estimate(tb, buf_factor):
        x_tiles = 2 * tb * d_in * x_item         # double-buffered x tile
        o_tiles = 2 * tb * d_out * out_item      # double-buffered out tile
        tmp = tb * max_width_p * (4 + mxu_item)  # live f32 acc + bf16 next operand
        return buf_factor * param_bytes + x_tiles + o_tiles + tmp

    def pick_tile(buf_factor):
        cands = [c for c in (4096, 2048, 1024, 512, 256, 128, 64, 32, 16, 8)
                 if c <= B]
        if B not in cands:
            cands = [B] + cands                  # allow one full-batch tile

        def steps(tb):
            return pl.cdiv(B, tb)

        def pick(pred):
            for tb in cands:                     # largest first
                if vmem_estimate(tb, buf_factor) <= vmem_budget and pred(steps(tb), tb):
                    return tb
            return None

        if tiny_io:
            # Minimize step count: grid=(1,) on single-TC parts, grid multiple
            # of 2 on v7x purely for the megacore split.
            tb = (pick(lambda s, t: s >= num_tc and s % num_tc == 0)
                  or pick(lambda s, t: s >= num_tc)
                  or pick(lambda s, t: True))
        else:
            # Non-trivial traffic: >= 2 steps per TensorCore so x/out DMAs
            # pipeline against compute on every core; prefer exact divisors.
            tb = (pick(lambda s, t: s >= 2 * num_tc and s % num_tc == 0 and B % t == 0)
                  or pick(lambda s, t: s >= 2 * num_tc and s % num_tc == 0)
                  or pick(lambda s, t: s >= 2 * num_tc)
                  or pick(lambda s, t: s >= num_tc)
                  or pick(lambda s, t: True))
        return tb if tb is not None else 8

    def run(buf_factor, single_buffer_params):
        if buf_factor * param_bytes > int(0.8 * vmem_budget):
            # TODO(synk): add K/N weight tiling (extra 'arbitrary' grid axes +
            # pl.when-initialized accumulator / pltpu.emit_pipeline) before
            # scaling hidden widths; hard-error instead of collapsing the tile.
            raise NotImplementedError(
                "MLP weights (%d bytes x%d buffering) exceed the VMEM budget "
                "(%d bytes); K/N weight tiling not implemented."
                % (param_bytes, buf_factor, vmem_budget))

        tb = batch_tile if batch_tile is not None else pick_tile(buf_factor)
        grid = (pl.cdiv(B, tb),)                 # ragged last tile -> masked store

        est = vmem_estimate(tb, buf_factor)
        vmem_limit = int(min(int(vmem_capacity * 0.75),
                             max(32 << 20, int(1.25 * est))))

        # x tile walks the batch; each weight/bias is one full-array resident
        # block with a constant index_map -> single-buffer it when supported to
        # halve its VMEM footprint (matters most on v7x's 64 MiB/TC).
        in_specs = [pl.BlockSpec((tb, d_in), lambda i: (i, 0))]
        for w_p, b_p in zip(p_weights, p_biases):
            extra = ({"pipeline_mode": pl.Buffered(1)}
                     if single_buffer_params else {})
            in_specs.append(pl.BlockSpec(w_p.shape, lambda i: (0, 0), **extra))
            in_specs.append(pl.BlockSpec(b_p.shape, lambda i: (0, 0), **extra))
        out_specs = pl.BlockSpec((tb, d_out), lambda i: (i, 0))

        kernel = functools.partial(_mlp_kernel, num_layers=num_layers,
                                   mxu_dtype=mxu_dtype)
        return pl.pallas_call(
            kernel,
            out_shape=jax.ShapeDtypeStruct((B, d_out), out_dtype),
            grid_spec=pltpu.PrefetchScalarGridSpec(
                num_scalar_prefetch=0,
                grid=grid,
                in_specs=in_specs,
                out_specs=out_specs,
            ),
            compiler_params=pltpu.CompilerParams(
                dimension_semantics=("parallel",),
                vmem_limit_bytes=vmem_limit,
            ),
        )(x, *flat_params)

    if _supports_buffered():
        try:
            return run(1, True)
        except NotImplementedError:
            raise
        except Exception:
            # pl.Buffered(1) constructs but does not lower on this jax/Mosaic
            # version: re-pick the batch tile against the *double-buffered*
            # weight footprint and retry with default buffering.
            return run(2, False)
    return run(2, False)


def init_mlp_params(key, dims):
    """nn.Linear-style U(-1/sqrt(fan_in), 1/sqrt(fan_in)) init; W stored [in, out]."""
    weights, biases = [], []
    for i in range(len(dims) - 1):
        fan_in, fan_out = dims[i], dims[i + 1]
        key, kw, kb = jax.random.split(key, 3)
        bound = 1.0 / (fan_in ** 0.5)
        w = jax.random.uniform(kw, (fan_in, fan_out), jnp.float32, -bound, bound)
        b = jax.random.uniform(kb, (1, fan_out), jnp.float32, -bound, bound)
        weights.append(w)
        biases.append(b)
    return weights, biases


def mlp_reference(x, weights, biases, mxu_dtype=None):
    """Plain-JAX reference. With mxu_dtype set, mimics the kernel's bf16 MXU operands."""
    h = x
    n = len(weights)
    for i, (w, b) in enumerate(zip(weights, biases)):
        if mxu_dtype is not None:
            h = jnp.dot(h.astype(mxu_dtype), w.astype(mxu_dtype),
                        preferred_element_type=jnp.float32) + b
        else:
            h = h @ w + b
        if i != n - 1:
            h = jnp.maximum(h, 0.0)
    return h


if __name__ == "__main__":
    key = jax.random.PRNGKey(0)
    dims = (32, 64, 64, 16)   # MLP(dims=[32, 64, 64, 16], activation='relu')
    batch = 256

    key, kx, kp = jax.random.split(key, 3)
    x = jax.random.normal(kx, (batch, dims[0]), jnp.float32)
    weights, biases = init_mlp_params(kp, dims)

    # Main path: auto tile (tiny traffic -> minimal-step grid), f32 I/O.
    out = jax.block_until_ready(mlp_forward(x, weights, biases))
    assert out.shape == (batch, dims[-1])

    ref_mxu = mlp_reference(x, weights, biases, mxu_dtype=jnp.bfloat16)
    ref_f32 = mlp_reference(x, weights, biases)
    assert jnp.allclose(out, ref_mxu, atol=1e-3, rtol=1e-3), "mismatch vs bf16-MXU reference"
    assert jnp.allclose(out, ref_f32, atol=5e-2, rtol=5e-2), "mismatch vs f32 reference"

    # bf16 streamed input (halves x HBM bytes when the producer emits bf16).
    x_bf16 = x.astype(jnp.bfloat16)
    out_bf16 = jax.block_until_ready(
        mlp_forward(x_bf16, weights, biases, out_dtype=jnp.float32))
    ref_bf16 = mlp_reference(x_bf16, weights, biases, mxu_dtype=jnp.bfloat16)
    assert jnp.allclose(out_bf16, ref_bf16, atol=1e-2, rtol=1e-2), "bf16-input mismatch"

    # Ragged batch that does not divide the tile: cdiv grid + masked last tile.
    xr = jax.random.normal(key, (100, dims[0]), jnp.float32)
    out_r = jax.block_until_ready(mlp_forward(xr, weights, biases, batch_tile=32))
    ref_r = mlp_reference(xr, weights, biases, mxu_dtype=jnp.bfloat16)
    assert out_r.shape == (100, dims[-1])
    assert jnp.allclose(out_r, ref_r, atol=1e-3, rtol=1e-3), "ragged-batch mismatch"

    print("KERNEL_OK")
</pallas_src>

<mosaic_0001>
module attributes {stable_mosaic.version = 11 : i64} {
  func.func @_mlp_kernel(%arg0: i32, %arg1: memref<256x32xf32, #tpu.memory_space<vmem>>, %arg2: memref<32x128xbf16, #tpu.memory_space<vmem>>, %arg3: memref<1x128xf32, #tpu.memory_space<vmem>>, %arg4: memref<128x128xbf16, #tpu.memory_space<vmem>>, %arg5: memref<1x128xf32, #tpu.memory_space<vmem>>, %arg6: memref<128x16xbf16, #tpu.memory_space<vmem>>, %arg7: memref<1x16xf32, #tpu.memory_space<vmem>>, %arg8: memref<256x16xf32, #tpu.memory_space<vmem>>) attributes {dimension_semantics = [#tpu.dimension_semantics<parallel>], iteration_bounds = array<i64: 1>, scalar_prefetch = 0 : i64, scratch_operands = 0 : i64, tpu.core_type = #tpu.core_type<tc>, window_params = [{transform_indices = @transform_0, window_bounds = array<i64: 256, 32>}, {pipeline_mode = #tpu.pipeline_mode<synchronous>, transform_indices = @transform_1, window_bounds = array<i64: 32, 128>}, {pipeline_mode = #tpu.pipeline_mode<synchronous>, transform_indices = @transform_2, window_bounds = array<i64: 1, 128>}, {pipeline_mode = #tpu.pipeline_mode<synchronous>, transform_indices = @transform_3, window_bounds = array<i64: 128, 128>}, {pipeline_mode = #tpu.pipeline_mode<synchronous>, transform_indices = @transform_4, window_bounds = array<i64: 1, 128>}, {pipeline_mode = #tpu.pipeline_mode<synchronous>, transform_indices = @transform_5, window_bounds = array<i64: 128, 16>}, {pipeline_mode = #tpu.pipeline_mode<synchronous>, transform_indices = @transform_6, window_bounds = array<i64: 1, 16>}, {transform_indices = @transform_7, window_bounds = array<i64: 256, 16>}]} {
    %c0 = arith.constant 0 : index
    %c0_0 = arith.constant 0 : index
    %0 = vector.load %arg1[%c0, %c0_0] : memref<256x32xf32, #tpu.memory_space<vmem>>, vector<256x32xf32>
    %1 = arith.truncf %0 : vector<256x32xf32> to vector<256x32xbf16>
    %c0_1 = arith.constant 0 : index
    %c0_2 = arith.constant 0 : index
    %2 = vector.load %arg2[%c0_1, %c0_2] : memref<32x128xbf16, #tpu.memory_space<vmem>>, vector<32x128xbf16>
    %cst = arith.constant dense<0.000000e+00> : vector<256x128xf32>
    %3 = tpu.matmul %1, %2, %cst {dimension_numbers = #tpu.dot_dimension_numbers<[1], [0], [0], [1], [0, 0, 1, 1], [], []>} : vector<256x32xbf16>, vector<32x128xbf16>, vector<256x128xf32> -> vector<256x128xf32>
    %c0_3 = arith.constant 0 : index
    %c0_4 = arith.constant 0 : index
    %4 = vector.load %arg3[%c0_3, %c0_4] : memref<1x128xf32, #tpu.memory_space<vmem>>, vector<1x128xf32>
    %5 = vector.broadcast %4 : vector<1x128xf32> to vector<256x128xf32>
    %6 = arith.addf %3, %5 : vector<256x128xf32>
    %cst_5 = arith.constant 0.000000e+00 : f32
    %7 = vector.broadcast %cst_5 : f32 to vector<256x128xf32>
    %8 = arith.maximumf %6, %7 : vector<256x128xf32>
    %9 = arith.truncf %8 : vector<256x128xf32> to vector<256x128xbf16>
    %c0_6 = arith.constant 0 : index
    %c0_7 = arith.constant 0 : index
    %10 = vector.load %arg4[%c0_6, %c0_7] : memref<128x128xbf16, #tpu.memory_space<vmem>>, vector<128x128xbf16>
    %cst_8 = arith.constant dense<0.000000e+00> : vector<256x128xf32>
    %11 = tpu.matmul %9, %10, %cst_8 {dimension_numbers = #tpu.dot_dimension_numbers<[1], [0], [0], [1], [0, 0, 1, 1], [], []>} : vector<256x128xbf16>, vector<128x128xbf16>, vector<256x128xf32> -> vector<256x128xf32>
    %c0_9 = arith.constant 0 : index
    %c0_10 = arith.constant 0 : index
    %12 = vector.load %arg5[%c0_9, %c0_10] : memref<1x128xf32, #tpu.memory_space<vmem>>, vector<1x128xf32>
    %13 = vector.broadcast %12 : vector<1x128xf32> to vector<256x128xf32>
    %14 = arith.addf %11, %13 : vector<256x128xf32>
    %cst_11 = arith.constant 0.000000e+00 : f32
    %15 = vector.broadcast %cst_11 : f32 to vector<256x128xf32>
    %16 = arith.maximumf %14, %15 : vector<256x128xf32>
    %17 = arith.truncf %16 : vector<256x128xf32> to vector<256x128xbf16>
    %c0_12 = arith.constant 0 : index
    %c0_13 = arith.constant 0 : index
    %18 = vector.load %arg6[%c0_12, %c0_13] : memref<128x16xbf16, #tpu.memory_space<vmem>>, vector<128x16xbf16>
    %cst_14 = arith.constant dense<0.000000e+00> : vector<256x16xf32>
    %19 = tpu.matmul %17, %18, %cst_14 {dimension_numbers = #tpu.dot_dimension_numbers<[1], [0], [0], [1], [0, 0, 1, 1], [], []>} : vector<256x128xbf16>, vector<128x16xbf16>, vector<256x16xf32> -> vector<256x16xf32>
    %c0_15 = arith.constant 0 : index
    %c0_16 = arith.constant 0 : index
    %20 = vector.load %arg7[%c0_15, %c0_16] : memref<1x16xf32, #tpu.memory_space<vmem>>, vector<1x16xf32>
    %21 = vector.broadcast %20 : vector<1x16xf32> to vector<256x16xf32>
    %22 = arith.addf %19, %21 : vector<256x16xf32>
    %c0_17 = arith.constant 0 : index
    %c0_18 = arith.constant 0 : index
    %23 = vector.load %arg8[%c0_17, %c0_18] : memref<256x16xf32, #tpu.memory_space<vmem>>, vector<256x16xf32>
    tpu.vector_store %arg8[%c0_17, %c0_18], %22 {strides = array<i32>} : memref<256x16xf32, #tpu.memory_space<vmem>>, vector<256x16xf32>,
    return
  }
  func.func @transform_0(%arg0: i32) -> (i32, i32) {
    %c0_i32 = arith.constant 0 : i32
    %c0_i32_0 = arith.constant 0 : i32
    return %arg0, %c0_i32 : i32, i32
  }
  func.func @transform_1(%arg0: i32) -> (i32, i32) {
    %c0_i32 = arith.constant 0 : i32
    %c0_i32_0 = arith.constant 0 : i32
    %c0_i32_1 = arith.constant 0 : i32
    return %c0_i32, %c0_i32_0 : i32, i32
  }
  func.func @transform_2(%arg0: i32) -> (i32, i32) {
    %c0_i32 = arith.constant 0 : i32
    %c0_i32_0 = arith.constant 0 : i32
    %c0_i32_1 = arith.constant 0 : i32
    return %c0_i32, %c0_i32_0 : i32, i32
  }
  func.func @transform_3(%arg0: i32) -> (i32, i32) {
    %c0_i32 = arith.constant 0 : i32
    %c0_i32_0 = arith.constant 0 : i32
    %c0_i32_1 = arith.constant 0 : i32
    return %c0_i32, %c0_i32_0 : i32, i32
  }
  func.func @transform_4(%arg0: i32) -> (i32, i32) {
    %c0_i32 = arith.constant 0 : i32
    %c0_i32_0 = arith.constant 0 : i32
    %c0_i32_1 = arith.constant 0 : i32
    return %c0_i32, %c0_i32_0 : i32, i32
  }
  func.func @transform_5(%arg0: i32) -> (i32, i32) {
    %c0_i32 = arith.constant 0 : i32
    %c0_i32_0 = arith.constant 0 : i32
    %c0_i32_1 = arith.constant 0 : i32
    return %c0_i32, %c0_i32_0 : i32, i32
  }
  func.func @transform_6(%arg0: i32) -> (i32, i32) {
    %c0_i32 = arith.constant 0 : i32
    %c0_i32_0 = arith.constant 0 : i32
    %c0_i32_1 = arith.constant 0 : i32
    return %c0_i32, %c0_i32_0 : i32, i32
  }
  func.func @transform_7(%arg0: i32) -> (i32, i32) {
    %c0_i32 = arith.constant 0 : i32
    %c0_i32_0 = arith.constant 0 : i32
    return %arg0, %c0_i32 : i32, i32
  }
}

module attributes {stable_mosaic.version = 11 : i64} {
  func.func @_mlp_kernel(%arg0: i32, %arg1: memref<256x32xf32, #tpu.memory_space<vmem>>, %arg2: memref<32x128xbf16, #tpu.memory_space<vmem>>, %arg3: memref<1x128xf32, #tpu.memory_space<vmem>>, %arg4: memref<128x128xbf16, #tpu.memory_space<vmem>>, %arg5: memref<1x128xf32, #tpu.memory_space<vmem>>, %arg6: memref<128x16xbf16, #tpu.memory_space<vmem>>, %arg7: memref<1x16xf32, #tpu.memory_space<vmem>>, %arg8: memref<256x16xf32, #tpu.memory_space<vmem>>) attributes {dimension_semantics = [#tpu.dimension_semantics<parallel>], iteration_bounds = array<i64: 1>, scalar_prefetch = 0 : i64, scratch_operands = 0 : i64, tpu.core_type = #tpu.core_type<tc>, window_params = [{transform_indices = @transform_0, window_bounds = array<i64: 256, 32>}, {pipeline_mode = #tpu.pipeline_mode<synchronous>, transform_indices = @transform_1, window_bounds = array<i64: 32, 128>}, {pipeline_mode = #tpu.pipeline_mode<synchronous>, transform_indices = @transform_2, window_bounds = array<i64: 1, 128>}, {pipeline_mode = #tpu.pipeline_mode<synchronous>, transform_indices = @transform_3, window_bounds = array<i64: 128, 128>}, {pipeline_mode = #tpu.pipeline_mode<synchronous>, transform_indices = @transform_4, window_bounds = array<i64: 1, 128>}, {pipeline_mode = #tpu.pipeline_mode<synchronous>, transform_indices = @transform_5, window_bounds = array<i64: 128, 16>}, {pipeline_mode = #tpu.pipeline_mode<synchronous>, transform_indices = @transform_6, window_bounds = array<i64: 1, 16>}, {transform_indices = @transform_7, window_bounds = array<i64: 256, 16>}]} {
    %c0 = arith.constant 0 : index
    %c0_0 = arith.constant 0 : index
    %0 = vector.load %arg1[%c0, %c0_0] : memref<256x32xf32, #tpu.memory_space<vmem>>, vector<256x32xf32>
    %1 = arith.truncf %0 : vector<256x32xf32> to vector<256x32xbf16>
    %c0_1 = arith.constant 0 : index
    %c0_2 = arith.constant 0 : index
    %2 = vector.load %arg2[%c0_1, %c0_2] : memref<32x128xbf16, #tpu.memory_space<vmem>>, vector<32x128xbf16>
    %cst = arith.constant dense<0.000000e+00> : vector<256x128xf32>
    %3 = tpu.matmul %1, %2, %cst {dimension_numbers = #tpu.dot_dimension_numbers<[1], [0], [0], [1], [0, 0, 1, 1], [], []>} : vector<256x32xbf16>, vector<32x128xbf16>, vector<256x128xf32> -> vector<256x128xf32>
    %c0_3 = arith.constant 0 : index
    %c0_4 = arith.constant 0 : index
    %4 = vector.load %arg3[%c0_3, %c0_4] : memref<1x128xf32, #tpu.memory_space<vmem>>, vector<1x128xf32>
    %5 = vector.broadcast %4 : vector<1x128xf32> to vector<256x128xf32>
    %6 = arith.addf %3, %5 : vector<256x128xf32>
    %cst_5 = arith.constant 0.000000e+00 : f32
    %7 = vector.broadcast %cst_5 : f32 to vector<256x128xf32>
    %8 = arith.maximumf %6, %7 : vector<256x128xf32>
    %9 = arith.truncf %8 : vector<256x128xf32> to vector<256x128xbf16>
    %c0_6 = arith.constant 0 : index
    %c0_7 = arith.constant 0 : index
    %10 = vector.load %arg4[%c0_6, %c0_7] : memref<128x128xbf16, #tpu.memory_space<vmem>>, vector<128x128xbf16>
    %cst_8 = arith.constant dense<0.000000e+00> : vector<256x128xf32>
    %11 = tpu.matmul %9, %10, %cst_8 {dimension_numbers = #tpu.dot_dimension_numbers<[1], [0], [0], [1], [0, 0, 1, 1], [], []>} : vector<256x128xbf16>, vector<128x128xbf16>, vector<256x128xf32> -> vector<256x128xf32>
    %c0_9 = arith.constant 0 : index
    %c0_10 = arith.constant 0 : index
    %12 = vector.load %arg5[%c0_9, %c0_10] : memref<1x128xf32, #tpu.memory_space<vmem>>, vector<1x128xf32>
    %13 = vector.broadcast %12 : vector<1x128xf32> to vector<256x128xf32>
    %14 = arith.addf %11, %13 : vector<256x128xf32>
    %cst_11 = arith.constant 0.000000e+00 : f32
    %15 = vector.broadcast %cst_11 : f32 to vector<256x128xf32>
    %16 = arith.maximumf %14, %15 : vector<256x128xf32>
    %17 = arith.truncf %16 : vector<256x128xf32> to vector<256x128xbf16>
    %c0_12 = arith.constant 0 : index
    %c0_13 = arith.constant 0 : index
    %18 = vector.load %arg6[%c0_12, %c0_13] : memref<128x16xbf16, #tpu.memory_space<vmem>>, vector<128x16xbf16>
    %cst_14 = arith.constant dense<0.000000e+00> : vector<256x16xf32>
    %19 = tpu.matmul %17, %18, %cst_14 {dimension_numbers = #tpu.dot_dimension_numbers<[1], [0], [0], [1], [0, 0, 1, 1], [], []>} : vector<256x128xbf16>, vector<128x16xbf16>, vector<256x16xf32> -> vector<256x16xf32>
    %c0_15 = arith.constant 0 : index
    %c0_16 = arith.constant 0 : index
    %20 = vector.load %arg7[%c0_15, %c0_16] : memref<1x16xf32, #tpu.memory_space<vmem>>, vector<1x16xf32>
    %21 = vector.broadcast %20 : vector<1x16xf32> to vector<256x16xf32>
    %22 = arith.addf %19, %21 : vector<256x16xf32>
    %c0_17 = arith.constant 0 : index
    %c0_18 = arith.constant 0 : index
    %23 = vector.load %arg8[%c0_17, %c0_18] : memref<256x16xf32, #tpu.memory_space<vmem>>, vector<256x16xf32>
    tpu.vector_store %arg8[%c0_17, %c0_18], %22 {strides = array<i32>} : memref<256x16xf32, #tpu.memory_space<vmem>>, vector<256x16xf32>,
    return
  }
  func.func @transform_0(%arg0: i32) -> (i32, i32) {
    %c0_i32 = arith.constant 0 : i32
    %c0_i32_0 = arith.constant 0 : i32
    return %arg0, %c0_i32 : i32, i32
  }
  func.func @transform_1(%arg0: i32) -> (i32, i32) {
    %c0_i32 = arith.constant 0 : i32
    %c0_i32_0 = arith.constant 0 : i32
    %c0_i32_1 = arith.constant 0 : i32
    return %c0_i32, %c0_i32_0 : i32, i32
  }
  func.func @transform_2(%arg0: i32) -> (i32, i32) {
    %c0_i32 = arith.constant 0 : i32
    %c0_i32_0 = arith.constant 0 : i32
    %c0_i32_1 = arith.constant 0 : i32
    return %c0_i32, %c0_i32_0 : i32, i32
  }
  func.func @transform_3(%arg0: i32) -> (i32, i32) {
    %c0_i32 = arith.constant 0 : i32
    %c0_i32_0 = arith.constant 0 : i32
    %c0_i32_1 = arith.constant 0 : i32
    return %c0_i32, %c0_i32_0 : i32, i32
  }
  func.func @transform_4(%arg0: i32) -> (i32, i32) {
    %c0_i32 = arith.constant 0 : i32
    %c0_i32_0 = arith.constant 0 : i32
    %c0_i32_1 = arith.constant 0 : i32
    return %c0_i32, %c0_i32_0 : i32, i32
  }
  func.func @transform_5(%arg0: i32) -> (i32, i32) {
    %c0_i32 = arith.constant 0 : i32
    %c0_i32_0 = arith.constant 0 : i32
    %c0_i32_1 = arith.constant 0 : i32
    return %c0_i32, %c0_i32_0 : i32, i32
  }
  func.func @transform_6(%arg0: i32) -> (i32, i32) {
    %c0_i32 = arith.constant 0 : i32
    %c0_i32_0 = arith.constant 0 : i32
    %c0_i32_1 = arith.constant 0 : i32
    return %c0_i32, %c0_i32_0 : i32, i32
  }
  func.func @transform_7(%arg0: i32) -> (i32, i32) {
    %c0_i32 = arith.constant 0 : i32
    %c0_i32_0 = arith.constant 0 : i32
    return %arg0, %c0_i32 : i32, i32
  }
}

</mosaic_0001>

<llo_original>
// kernel: tpu_custom_call.1
$region0: #{tpu_custom_call.1}
  #allocation0 [shape = 'u32[]', space=smem, size = 0x4, offset = 0x4, fixed_abs, tag = 'smem constant byte address 0x4 - core index']
  #allocation1 [shape = 'u32[144,128]{1,0:T(1,128)}', space=vmem, size = 0x12000, scoped, tag = 'internal scratch']
  %s0 = inlined_call_operand.vmem [shape: f32[256,32], index: 0, kind: input, shape index: {}]
  %s1 = inlined_call_operand.vmem [shape: bf16[32,128], index: 1, kind: input, shape index: {}]
  %s2 = inlined_call_operand.vmem [shape: f32[1,128], index: 2, kind: input, shape index: {}]
  %s3 = inlined_call_operand.vmem [shape: bf16[128,128], index: 3, kind: input, shape index: {}]
  %s4 = inlined_call_operand.vmem [shape: f32[1,128], index: 4, kind: input, shape index: {}]
  %s5 = inlined_call_operand.vmem [shape: bf16[128,16], index: 5, kind: input, shape index: {}]
  %s6 = inlined_call_operand.vmem [shape: f32[1,16], index: 6, kind: input, shape index: {}]
  %s7 = inlined_call_operand.vmem [shape: f32[256,16], index: 7, kind: output, shape index: {}]
  %s8 = sld [smem:[#allocation0]]
  $region38: #{tpu_custom_call.1} parent=0
    _
  %s10 = ssub.s32 1, %s8
  %s11 = scalar_select 0, %s10, %s8
  // Predicated region
  $region2: #{tpu_custom_call.1} parent=0 // pred_check
    _
  $region3: #{tpu_custom_call.1} parent=0 // pred_check_branch
    %13 = sbr.rel (0) target = $region5
  $region4: #{tpu_custom_call.1} parent=0 // pred_region
    _
  $region5: #{tpu_custom_call.1} parent=0 // pred_fallthru
    _
  // Predicated region
  $region6: #{tpu_custom_call.1} parent=0 // pred_check
    _
  $region7: #{tpu_custom_call.1} parent=0 // pred_check_branch
    %15 = sbr.rel (0) target = $region9
  $region8: #{tpu_custom_call.1} parent=0 // pred_region
    _
  $region9: #{tpu_custom_call.1} parent=0 // pred_fallthru
    _
  // Predicated region
  $region10: #{tpu_custom_call.1} parent=0 // pred_check
    _
  $region11: #{tpu_custom_call.1} parent=0 // pred_check_branch
    %17 = sbr.rel (0) target = $region13
  $region12: #{tpu_custom_call.1} parent=0 // pred_region
    _
  $region13: #{tpu_custom_call.1} parent=0 // pred_fallthru
    _
  // Predicated region
  $region14: #{tpu_custom_call.1} parent=0 // pred_check
    _
  $region15: #{tpu_custom_call.1} parent=0 // pred_check_branch
    %19 = sbr.rel (0) target = $region17
  $region16: #{tpu_custom_call.1} parent=0 // pred_region
    _
  $region17: #{tpu_custom_call.1} parent=0 // pred_fallthru
    _
  // Predicated region
  $region18: #{tpu_custom_call.1} parent=0 // pred_check
    _
  $region19: #{tpu_custom_call.1} parent=0 // pred_check_branch
    %21 = sbr.rel (0) target = $region21
  $region20: #{tpu_custom_call.1} parent=0 // pred_region
    _
  $region21: #{tpu_custom_call.1} parent=0 // pred_fallthru
    _
  // Predicated region
  $region22: #{tpu_custom_call.1} parent=0 // pred_check
    _
  $region23: #{tpu_custom_call.1} parent=0 // pred_check_branch
    %23 = sbr.rel (0) target = $region25
  $region24: #{tpu_custom_call.1} parent=0 // pred_region
    _
  $region25: #{tpu_custom_call.1} parent=0 // pred_fallthru
    _
  // Predicated region
  $region26: #{tpu_custom_call.1} parent=0 // pred_check
    _
  $region27: #{tpu_custom_call.1} parent=0 // pred_check_branch
    %25 = sbr.rel (0) target = $region29
  $region28: #{tpu_custom_call.1} parent=0 // pred_region
    _
  $region29: #{tpu_custom_call.1} parent=0 // pred_fallthru
    _
  %v27 = vld [vmem:[%s0] sm:$0xff]
  %v28 = vld [vmem:[%s0 + $0x8] sm:$0xff]
  %v29 = vld [vmem:[%s0 + $0x10] sm:$0xff]
  %v30 = vld [vmem:[%s0 + $0x18] sm:$0xff]
  %v31 = vld [vmem:[%s0 + $0x20] sm:$0xff]
  %v32 = vld [vmem:[%s0 + $0x28] sm:$0xff]
  %v33 = vld [vmem:[%s0 + $0x30] sm:$0xff]
  %v34 = vld [vmem:[%s0 + $0x38] sm:$0xff]
  %v35 = vld [vmem:[%s0 + $0x40] sm:$0xff]
  %v36 = vld [vmem:[%s0 + $0x48] sm:$0xff]
  %v37 = vld [vmem:[%s0 + $0x50] sm:$0xff]
  %v38 = vld [vmem:[%s0 + $0x58] sm:$0xff]
  %v39 = vld [vmem:[%s0 + $0x60] sm:$0xff]
  %v40 = vld [vmem:[%s0 + $0x68] sm:$0xff]
  %v41 = vld [vmem:[%s0 + $0x70] sm:$0xff]
  %v42 = vld [vmem:[%s0 + $0x78] sm:$0xff]
  %v43 = vld [vmem:[%s0 + $0x80] sm:$0xff]
  %v44 = vld [vmem:[%s0 + $0x88] sm:$0xff]
  %v45 = vld [vmem:[%s0 + $0x90] sm:$0xff]
  %v46 = vld [vmem:[%s0 + $0x98] sm:$0xff]
  %v47 = vld [vmem:[%s0 + $0xa0] sm:$0xff]
  %v48 = vld [vmem:[%s0 + $0xa8] sm:$0xff]
  %v49 = vld [vmem:[%s0 + $0xb0] sm:$0xff]
  %v50 = vld [vmem:[%s0 + $0xb8] sm:$0xff]
  %v51 = vld [vmem:[%s0 + $0xc0] sm:$0xff]
  %v52 = vld [vmem:[%s0 + $0xc8] sm:$0xff]
  %v53 = vld [vmem:[%s0 + $0xd0] sm:$0xff]
  %v54 = vld [vmem:[%s0 + $0xd8] sm:$0xff]
  %v55 = vld [vmem:[%s0 + $0xe0] sm:$0xff]
  %v56 = vld [vmem:[%s0 + $0xe8] sm:$0xff]
  %v57 = vld [vmem:[%s0 + $0xf0] sm:$0xff]
  %v58 = vld [vmem:[%s0 + $0xf8] sm:$0xff]
  %v59 = vpack.c.bf16 %v28, %v27
  %v60 = vpack.c.bf16 %v30, %v29
  %v61 = vpack.c.bf16 %v32, %v31
  %v62 = vpack.c.bf16 %v34, %v33
  %v63 = vpack.c.bf16 %v36, %v35
  %v64 = vpack.c.bf16 %v38, %v37
  %v65 = vpack.c.bf16 %v40, %v39
  %v66 = vpack.c.bf16 %v42, %v41
  %v67 = vpack.c.bf16 %v44, %v43
  %v68 = vpack.c.bf16 %v46, %v45
  %v69 = vpack.c.bf16 %v48, %v47
  %v70 = vpack.c.bf16 %v50, %v49
  %v71 = vpack.c.bf16 %v52, %v51
  %v72 = vpack.c.bf16 %v54, %v53
  %v73 = vpack.c.bf16 %v56, %v55
  %v74 = vpack.c.bf16 %v58, %v57
  %v75 = vld [vmem:[%s1] sm:$0xf]
  %v76 = vld [vmem:[%s1 + $0x4] sm:$0xf]
  %v77 = vld [vmem:[%s1 + $0x8] sm:$0xf]
  %v78 = vld [vmem:[%s1 + $0xc] sm:$0xf]
  %v79 = vld [vmem:[%s2] sm:$0x1]
  %v81 = vlaneseq
  %v82 = vshrl.u32 %v81, 7
  %v83 = vsub.s32 0, %v82
  %v84 = vrot.slane %v79, %v83
  %v90 = vunpack.c.l.b16 %v75
  %v91 = vunpack.c.l.b16 %v76
  %v92 = vunpack.c.l.b16 %v77
  %v93 = vunpack.c.l.b16 %v78
  %v94 = vpack.c.b16 %v91, %v90
  %v95 = vpack.c.b16 %v93, %v92
  %vm98 = vcmask 261120
  %v100 = vsel %vm98, %v59, 0
  %v103 = vsel %vm98, %v60, 0
  %v106 = vsel %vm98, %v61, 0
  %v109 = vsel %vm98, %v62, 0
  %v112 = vsel %vm98, %v63, 0
  %v115 = vsel %vm98, %v64, 0
  %v118 = vsel %vm98, %v65, 0
  %v121 = vsel %vm98, %v66, 0
  %v124 = vsel %vm98, %v67, 0
  %v127 = vsel %vm98, %v68, 0
  %v130 = vsel %vm98, %v69, 0
  %v133 = vsel %vm98, %v70, 0
  %v136 = vsel %vm98, %v71, 0
  %v139 = vsel %vm98, %v72, 0
  %v142 = vsel %vm98, %v73, 0
  %v145 = vsel %vm98, %v74, 0
  %147 = vmatprep.subr.bf16.mxu0 0
  %148 = vmatpush1.bf16.msra.mxu0 %v94
  %149 = vmatprep.subr.bf16.mxu0 0
  %150 = vmatpush1.bf16.msra.mxu0 %v95
  %151 = vmatprep.subr.bf16.mxu0 0
  %152 = vmatpush1.bf16.msra.mxu0 0
  %153 = vmatprep.subr.bf16.mxu0 0
  %154 = vmatpush1.bf16.msra.mxu0 0
  %155 = vmatprep.subr.bf16.mxu0 0
  %156 = vmatpush1.bf16.msra.mxu0 0
  %157 = vmatprep.subr.bf16.mxu0 0
  %158 = vmatpush1.bf16.msra.mxu0 0
  %159 = vmatprep.subr.bf16.mxu0 0
  %160 = vmatpush1.bf16.msra.mxu0 0
  %161 = vmatprep.subr.bf16.mxu0 0
  %162 = vmatpush1.bf16.msra.mxu0 0
  %163 = vmatprep.subr.bf16.mxu0 0
  %164 = vmatpush1.bf16.msra.mxu0 0
  %165 = vmatprep.subr.bf16.mxu0 0
  %166 = vmatpush1.bf16.msra.mxu0 0
  %167 = vmatprep.subr.bf16.mxu0 0
  %168 = vmatpush1.bf16.msra.mxu0 0
  %169 = vmatprep.subr.bf16.mxu0 0
  %170 = vmatpush1.bf16.msra.mxu0 0
  %171 = vmatprep.subr.bf16.mxu0 0
  %172 = vmatpush1.bf16.msra.mxu0 0
  %173 = vmatprep.subr.bf16.mxu0 0
  %174 = vmatpush1.bf16.msra.mxu0 0
  %175 = vmatprep.subr.bf16.mxu0 0
  %176 = vmatpush1.bf16.msra.mxu0 0
  %177 = vmatprep.subr.bf16.mxu0 0
  %178 = vmatpush1.bf16.msra.mxu0 0
  %179 = vmatprep.mubr.bf16.mxu0 0
  %180 = vmatmul.mubr.bf16.gmra.mrb[0].mxu0 %v100
  %v181 = vpop.f32.mrb[0].mxu0
  %v182 = vadd.f32 %v84, %v181
  %v183 = vpop.f32.mrb[0].mxu0
  %v184 = vpop.f32.mrb[0].mxu0
  %v185 = vadd.f32 %v84, %v184
  %v186 = vpop.f32.mrb[0].mxu0
  %187 = vmatprep.mubr.bf16.mxu0 0
  %188 = vmatmul.mubr.bf16.gmra.mrb[0].mxu0 %v103
  %v189 = vpop.f32.mrb[0].mxu0
  %v190 = vadd.f32 %v84, %v189
  %v191 = vpop.f32.mrb[0].mxu0
  %v192 = vpop.f32.mrb[0].mxu0
  %v193 = vadd.f32 %v84, %v192
  %v194 = vpop.f32.mrb[0].mxu0
  %195 = vmatprep.mubr.bf16.mxu0 0
  %196 = vmatmul.mubr.bf16.gmra.mrb[0].mxu0 %v106
  %v197 = vpop.f32.mrb[0].mxu0
  %v198 = vadd.f32 %v84, %v197
  %v199 = vpop.f32.mrb[0].mxu0
  %v200 = vpop.f32.mrb[0].mxu0
  %v201 = vadd.f32 %v84, %v200
  %v202 = vpop.f32.mrb[0].mxu0
  %203 = vmatprep.mubr.bf16.mxu0 0
  %204 = vmatmul.mubr.bf16.gmra.mrb[0].mxu0 %v109
  %v205 = vpop.f32.mrb[0].mxu0
  %v206 = vadd.f32 %v84, %v205
  %v207 = vpop.f32.mrb[0].mxu0
  %v208 = vpop.f32.mrb[0].mxu0
  %v209 = vadd.f32 %v84, %v208
  %v210 = vpop.f32.mrb[0].mxu0
  %211 = vmatprep.mubr.bf16.mxu0 0
  %212 = vmatmul.mubr.bf16.gmra.mrb[0].mxu0 %v112
  %v213 = vpop.f32.mrb[0].mxu0
  %v214 = vadd.f32 %v84, %v213
  %v215 = vpop.f32.mrb[0].mxu0
  %v216 = vpop.f32.mrb[0].mxu0
  %v217 = vadd.f32 %v84, %v216
  %v218 = vpop.f32.mrb[0].mxu0
  %219 = vmatprep.mubr.bf16.mxu0 0
  %220 = vmatmul.mubr.bf16.gmra.mrb[0].mxu0 %v115
  %v221 = vpop.f32.mrb[0].mxu0
  %v222 = vadd.f32 %v84, %v221
  %v223 = vpop.f32.mrb[0].mxu0
  %v224 = vpop.f32.mrb[0].mxu0
  %v225 = vadd.f32 %v84, %v224
  %v226 = vpop.f32.mrb[0].mxu0
  %227 = vmatprep.mubr.bf16.mxu0 0
  %228 = vmatmul.mubr.bf16.gmra.mrb[0].mxu0 %v118
  %v229 = vpop.f32.mrb[0].mxu0
  %v230 = vadd.f32 %v84, %v229
  %v231 = vpop.f32.mrb[0].mxu0
  %v232 = vpop.f32.mrb[0].mxu0
  %v233 = vadd.f32 %v84, %v232
  %v234 = vpop.f32.mrb[0].mxu0
  %235 = vmatprep.mubr.bf16.mxu0 0
  %236 = vmatmul.mubr.bf16.gmra.mrb[0].mxu0 %v121
  %v237 = vpop.f32.mrb[0].mxu0
  %v238 = vadd.f32 %v84, %v237
  %v239 = vpop.f32.mrb[0].mxu0
  %v240 = vpop.f32.mrb[0].mxu0
  %v241 = vadd.f32 %v84, %v240
  %v242 = vpop.f32.mrb[0].mxu0
  %243 = vmatprep.mubr.bf16.mxu0 0
  %244 = vmatmul.mubr.bf16.gmra.mrb[0].mxu0 %v124
  %v245 = vpop.f32.mrb[0].mxu0
  %v246 = vadd.f32 %v84, %v245
  %v247 = vpop.f32.mrb[0].mxu0
  %v248 = vpop.f32.mrb[0].mxu0
  %v249 = vadd.f32 %v84, %v248
  %v250 = vpop.f32.mrb[0].mxu0
  %251 = vmatprep.mubr.bf16.mxu0 0
  %252 = vmatmul.mubr.bf16.gmra.mrb[0].mxu0 %v127
  %v253 = vpop.f32.mrb[0].mxu0
  %v254 = vadd.f32 %v84, %v253
  %v255 = vpop.f32.mrb[0].mxu0
  %v256 = vpop.f32.mrb[0].mxu0
  %v257 = vadd.f32 %v84, %v256
  %v258 = vpop.f32.mrb[0].mxu0
  %259 = vmatprep.mubr.bf16.mxu0 0
  %260 = vmatmul.mubr.bf16.gmra.mrb[0].mxu0 %v130
  %v261 = vpop.f32.mrb[0].mxu0
  %v262 = vadd.f32 %v84, %v261
  %v263 = vpop.f32.mrb[0].mxu0
  %v264 = vpop.f32.mrb[0].mxu0
  %v265 = vadd.f32 %v84, %v264
  %v266 = vpop.f32.mrb[0].mxu0
  %267 = vmatprep.mubr.bf16.mxu0 0
  %268 = vmatmul.mubr.bf16.gmra.mrb[0].mxu0 %v133
  %v269 = vpop.f32.mrb[0].mxu0
  %v270 = vadd.f32 %v84, %v269
  %v271 = vpop.f32.mrb[0].mxu0
  %v272 = vpop.f32.mrb[0].mxu0
  %v273 = vadd.f32 %v84, %v272
  %v274 = vpop.f32.mrb[0].mxu0
  %275 = vmatprep.mubr.bf16.mxu0 0
  %276 = vmatmul.mubr.bf16.gmra.mrb[0].mxu0 %v136
  %v277 = vpop.f32.mrb[0].mxu0
  %v278 = vadd.f32 %v84, %v277
  %v279 = vpop.f32.mrb[0].mxu0
  %v280 = vpop.f32.mrb[0].mxu0
  %v281 = vadd.f32 %v84, %v280
  %v282 = vpop.f32.mrb[0].mxu0
  %283 = vmatprep.mubr.bf16.mxu0 0
  %284 = vmatmul.mubr.bf16.gmra.mrb[0].mxu0 %v139
  %v285 = vpop.f32.mrb[0].mxu0
  %v286 = vadd.f32 %v84, %v285
  %v287 = vpop.f32.mrb[0].mxu0
  %v288 = vpop.f32.mrb[0].mxu0
  %v289 = vadd.f32 %v84, %v288
  %v290 = vpop.f32.mrb[0].mxu0
  %291 = vmatprep.mubr.bf16.mxu0 0
  %292 = vmatmul.mubr.bf16.gmra.mrb[0].mxu0 %v142
  %v293 = vpop.f32.mrb[0].mxu0
  %v294 = vadd.f32 %v84, %v293
  %v295 = vpop.f32.mrb[0].mxu0
  %v296 = vpop.f32.mrb[0].mxu0
  %v297 = vadd.f32 %v84, %v296
  %v298 = vpop.f32.mrb[0].mxu0
  %299 = vmatprep.mubr.bf16.mxu0 0
  %300 = vmatmul.mubr.bf16.gmra.mrb[0].mxu0 %v145
  %v301 = vpop.f32.mrb[0].mxu0
  %v302 = vadd.f32 %v84, %v301
  %v303 = vpop.f32.mrb[0].mxu0
  %v304 = vpop.f32.mrb[0].mxu0
  %v305 = vadd.f32 %v84, %v304
  %v306 = vpop.f32.mrb[0].mxu0
  %307 = vdwg.mxu0
  %v308 = vmax.f32 %v182, 0.0
  %v309 = vmax.f32 %v185, 0.0
  %v310 = vmax.f32 %v190, 0.0
  %v311 = vmax.f32 %v193, 0.0
  %v312 = vmax.f32 %v198, 0.0
  %v313 = vmax.f32 %v201, 0.0
  %v314 = vmax.f32 %v206, 0.0
  %v315 = vmax.f32 %v209, 0.0
  %v316 = vmax.f32 %v214, 0.0
  %v317 = vmax.f32 %v217, 0.0
  %v318 = vmax.f32 %v222, 0.0
  %v319 = vmax.f32 %v225, 0.0
  %v320 = vmax.f32 %v230, 0.0
  %v321 = vmax.f32 %v233, 0.0
  %v322 = vmax.f32 %v238, 0.0
  %v323 = vmax.f32 %v241, 0.0
  %v324 = vmax.f32 %v246, 0.0
  %v325 = vmax.f32 %v249, 0.0
  %v326 = vmax.f32 %v254, 0.0
  %v327 = vmax.f32 %v257, 0.0
  %v328 = vmax.f32 %v262, 0.0
  %v329 = vmax.f32 %v265, 0.0
  %v330 = vmax.f32 %v270, 0.0
  %v331 = vmax.f32 %v273, 0.0
  %v332 = vmax.f32 %v278, 0.0
  %v333 = vmax.f32 %v281, 0.0
  %v334 = vmax.f32 %v286, 0.0
  %v335 = vmax.f32 %v289, 0.0
  %v336 = vmax.f32 %v294, 0.0
  %v337 = vmax.f32 %v297, 0.0
  %v338 = vmax.f32 %v302, 0.0
  %v339 = vmax.f32 %v305, 0.0
  %v340 = vpack.c.bf16 %v309, %v308
  %v341 = vpack.c.bf16 %v311, %v310
  %v342 = vpack.c.bf16 %v313, %v312
  %v343 = vpack.c.bf16 %v315, %v314
  %v344 = vpack.c.bf16 %v317, %v316
  %v345 = vpack.c.bf16 %v319, %v318
  %v346 = vpack.c.bf16 %v321, %v320
  %v347 = vpack.c.bf16 %v323, %v322
  %v348 = vpack.c.bf16 %v325, %v324
  %v349 = vpack.c.bf16 %v327, %v326
  %v350 = vpack.c.bf16 %v329, %v328
  %v351 = vpack.c.bf16 %v331, %v330
  %v352 = vpack.c.bf16 %v333, %v332
  %v353 = vpack.c.bf16 %v335, %v334
  %v354 = vpack.c.bf16 %v337, %v336
  %v355 = vpack.c.bf16 %v339, %v338
  %v356 = vld [vmem:[%s3] sm:$0xf]
  %v357 = vld [vmem:[%s3 + $0x4] sm:$0xf]
  %v358 = vld [vmem:[%s3 + $0x8] sm:$0xf]
  %v359 = vld [vmem:[%s3 + $0xc] sm:$0xf]
  %v360 = vld [vmem:[%s3 + $0x10] sm:$0xf]
  %v361 = vld [vmem:[%s3 + $0x14] sm:$0xf]
  %v362 = vld [vmem:[%s3 + $0x18] sm:$0xf]
  %v363 = vld [vmem:[%s3 + $0x1c] sm:$0xf]
  %v364 = vld [vmem:[%s3 + $0x20] sm:$0xf]
  %v365 = vld [vmem:[%s3 + $0x24] sm:$0xf]
  %v366 = vld [vmem:[%s3 + $0x28] sm:$0xf]
  %v367 = vld [vmem:[%s3 + $0x2c] sm:$0xf]
  %v368 = vld [vmem:[%s3 + $0x30] sm:$0xf]
  %v369 = vld [vmem:[%s3 + $0x34] sm:$0xf]
  %v370 = vld [vmem:[%s3 + $0x38] sm:$0xf]
  %v371 = vld [vmem:[%s3 + $0x3c] sm:$0xf]
  %v372 = vld [vmem:[%s4] sm:$0x1]
  %v374 = vlaneseq
  %v375 = vshrl.u32 %v374, 7
  %v376 = vsub.s32 0, %v375
  %v377 = vrot.slane %v372, %v376
  %v395 = vunpack.c.l.b16 %v356
  %v396 = vunpack.c.l.b16 %v357
  %v397 = vunpack.c.l.b16 %v358
  %v398 = vunpack.c.l.b16 %v359
  %v399 = vunpack.c.l.b16 %v360
  %v400 = vunpack.c.l.b16 %v361
  %v401 = vunpack.c.l.b16 %v362
  %v402 = vunpack.c.l.b16 %v363
  %v403 = vunpack.c.l.b16 %v364
  %v404 = vunpack.c.l.b16 %v365
  %v405 = vunpack.c.l.b16 %v366
  %v406 = vunpack.c.l.b16 %v367
  %v407 = vunpack.c.l.b16 %v368
  %v408 = vunpack.c.l.b16 %v369
  %v409 = vunpack.c.l.b16 %v370
  %v410 = vunpack.c.l.b16 %v371
  %v411 = vpack.c.b16 %v396, %v395
  %v412 = vpack.c.b16 %v398, %v397
  %v413 = vpack.c.b16 %v400, %v399
  %v414 = vpack.c.b16 %v402, %v401
  %v415 = vpack.c.b16 %v404, %v403
  %v416 = vpack.c.b16 %v406, %v405
  %v417 = vpack.c.b16 %v408, %v407
  %v418 = vpack.c.b16 %v410, %v409
  %427 = vmatprep.subr.bf16.mxu0 0
  %428 = vmatpush1.bf16.msra.mxu0 %v411
  %429 = vmatprep.subr.bf16.mxu0 0
  %430 = vmatpush1.bf16.msra.mxu0 %v412
  %431 = vmatprep.subr.bf16.mxu0 0
  %432 = vmatpush1.bf16.msra.mxu0 %v413
  %433 = vmatprep.subr.bf16.mxu0 0
  %434 = vmatpush1.bf16.msra.mxu0 %v414
  %435 = vmatprep.subr.bf16.mxu0 0
  %436 = vmatpush1.bf16.msra.mxu0 %v415
  %437 = vmatprep.subr.bf16.mxu0 0
  %438 = vmatpush1.bf16.msra.mxu0 %v416
  %439 = vmatprep.subr.bf16.mxu0 0
  %440 = vmatpush1.bf16.msra.mxu0 %v417
  %441 = vmatprep.subr.bf16.mxu0 0
  %442 = vmatpush1.bf16.msra.mxu0 %v418
  %443 = vmatprep.subr.bf16.mxu0 0
  %444 = vmatpush1.bf16.msra.mxu0 0
  %445 = vmatprep.subr.bf16.mxu0 0
  %446 = vmatpush1.bf16.msra.mxu0 0
  %447 = vmatprep.subr.bf16.mxu0 0
  %448 = vmatpush1.bf16.msra.mxu0 0
  %449 = vmatprep.subr.bf16.mxu0 0
  %450 = vmatpush1.bf16.msra.mxu0 0
  %451 = vmatprep.subr.bf16.mxu0 0
  %452 = vmatpush1.bf16.msra.mxu0 0
  %453 = vmatprep.subr.bf16.mxu0 0
  %454 = vmatpush1.bf16.msra.mxu0 0
  %455 = vmatprep.subr.bf16.mxu0 0
  %456 = vmatpush1.bf16.msra.mxu0 0
  %457 = vmatprep.subr.bf16.mxu0 0
  %458 = vmatpush1.bf16.msra.mxu0 0
  %459 = vmatprep.mubr.bf16.mxu0 0
  %460 = vmatmul.mubr.bf16.gmra.mrb[0].mxu0 %v340
  %v461 = vpop.f32.mrb[0].mxu0
  %v462 = vadd.f32 %v377, %v461
  %v463 = vpop.f32.mrb[0].mxu0
  %v464 = vpop.f32.mrb[0].mxu0
  %v465 = vadd.f32 %v377, %v464
  %v466 = vpop.f32.mrb[0].mxu0
  %467 = vmatprep.mubr.bf16.mxu0 0
  %468 = vmatmul.mubr.bf16.gmra.mrb[0].mxu0 %v341
  %v469 = vpop.f32.mrb[0].mxu0
  %v470 = vadd.f32 %v377, %v469
  %v471 = vpop.f32.mrb[0].mxu0
  %v472 = vpop.f32.mrb[0].mxu0
  %v473 = vadd.f32 %v377, %v472
  %v474 = vpop.f32.mrb[0].mxu0
  %475 = vmatprep.mubr.bf16.mxu0 0
  %476 = vmatmul.mubr.bf16.gmra.mrb[0].mxu0 %v342
  %v477 = vpop.f32.mrb[0].mxu0
  %v478 = vadd.f32 %v377, %v477
  %v479 = vpop.f32.mrb[0].mxu0
  %v480 = vpop.f32.mrb[0].mxu0
  %v481 = vadd.f32 %v377, %v480
  %v482 = vpop.f32.mrb[0].mxu0
  %483 = vmatprep.mubr.bf16.mxu0 0
  %484 = vmatmul.mubr.bf16.gmra.mrb[0].mxu0 %v343
  %v485 = vpop.f32.mrb[0].mxu0
  %v486 = vadd.f32 %v377, %v485
  %v487 = vpop.f32.mrb[0].mxu0
  %v488 = vpop.f32.mrb[0].mxu0
  %v489 = vadd.f32 %v377, %v488
  %v490 = vpop.f32.mrb[0].mxu0
  %491 = vmatprep.mubr.bf16.mxu0 0
  %492 = vmatmul.mubr.bf16.gmra.mrb[0].mxu0 %v344
  %v493 = vpop.f32.mrb[0].mxu0
  %v494 = vadd.f32 %v377, %v493
  %v495 = vpop.f32.mrb[0].mxu0
  %v496 = vpop.f32.mrb[0].mxu0
  %v497 = vadd.f32 %v377, %v496
  %v498 = vpop.f32.mrb[0].mxu0
  %499 = vmatprep.mubr.bf16.mxu0 0
  %500 = vmatmul.mubr.bf16.gmra.mrb[0].mxu0 %v345
  %v501 = vpop.f32.mrb[0].mxu0
  %v502 = vadd.f32 %v377, %v501
  %v503 = vpop.f32.mrb[0].mxu0
  %v504 = vpop.f32.mrb[0].mxu0
  %v505 = vadd.f32 %v377, %v504
  %v506 = vpop.f32.mrb[0].mxu0
  %507 = vmatprep.mubr.bf16.mxu0 0
  %508 = vmatmul.mubr.bf16.gmra.mrb[0].mxu0 %v346
  %v509 = vpop.f32.mrb[0].mxu0
  %v510 = vadd.f32 %v377, %v509
  %v511 = vpop.f32.mrb[0].mxu0
  %v512 = vpop.f32.mrb[0].mxu0
  %v513 = vadd.f32 %v377, %v512
  %v514 = vpop.f32.mrb[0].mxu0
  %515 = vmatprep.mubr.bf16.mxu0 0
  %516 = vmatmul.mubr.bf16.gmra.mrb[0].mxu0 %v347
  %v517 = vpop.f32.mrb[0].mxu0
  %v518 = vadd.f32 %v377, %v517
  %v519 = vpop.f32.mrb[0].mxu0
  %v520 = vpop.f32.mrb[0].mxu0
  %v521 = vadd.f32 %v377, %v520
  %v522 = vpop.f32.mrb[0].mxu0
  %523 = vmatprep.mubr.bf16.mxu0 0
  %524 = vmatmul.mubr.bf16.gmra.mrb[0].mxu0 %v348
  %v525 = vpop.f32.mrb[0].mxu0
  %v526 = vadd.f32 %v377, %v525
  %v527 = vpop.f32.mrb[0].mxu0
  %v528 = vpop.f32.mrb[0].mxu0
  %v529 = vadd.f32 %v377, %v528
  %v530 = vpop.f32.mrb[0].mxu0
  %531 = vmatprep.mubr.bf16.mxu0 0
  %532 = vmatmul.mubr.bf16.gmra.mrb[0].mxu0 %v349
  %v533 = vpop.f32.mrb[0].mxu0
  %v534 = vadd.f32 %v377, %v533
  %v535 = vpop.f32.mrb[0].mxu0
  %v536 = vpop.f32.mrb[0].mxu0
  %v537 = vadd.f32 %v377, %v536
  %v538 = vpop.f32.mrb[0].mxu0
  %539 = vmatprep.mubr.bf16.mxu0 0
  %540 = vmatmul.mubr.bf16.gmra.mrb[0].mxu0 %v350
  %v541 = vpop.f32.mrb[0].mxu0
  %v542 = vadd.f32 %v377, %v541
  %v543 = vpop.f32.mrb[0].mxu0
  %v544 = vpop.f32.mrb[0].mxu0
  %v545 = vadd.f32 %v377, %v544
  %v546 = vpop.f32.mrb[0].mxu0
  %547 = vmatprep.mubr.bf16.mxu0 0
  %548 = vmatmul.mubr.bf16.gmra.mrb[0].mxu0 %v351
  %v549 = vpop.f32.mrb[0].mxu0
  %v550 = vadd.f32 %v377, %v549
  %v551 = vpop.f32.mrb[0].mxu0
  %v552 = vpop.f32.mrb[0].mxu0
  %v553 = vadd.f32 %v377, %v552
  %v554 = vpop.f32.mrb[0].mxu0
  %555 = vmatprep.mubr.bf16.mxu0 0
  %556 = vmatmul.mubr.bf16.gmra.mrb[0].mxu0 %v352
  %v557 = vpop.f32.mrb[0].mxu0
  %v558 = vadd.f32 %v377, %v557
  %v559 = vpop.f32.mrb[0].mxu0
  %v560 = vpop.f32.mrb[0].mxu0
  %v561 = vadd.f32 %v377, %v560
  %v562 = vpop.f32.mrb[0].mxu0
  %563 = vmatprep.mubr.bf16.mxu0 0
  %564 = vmatmul.mubr.bf16.gmra.mrb[0].mxu0 %v353
  %v565 = vpop.f32.mrb[0].mxu0
  %v566 = vadd.f32 %v377, %v565
  %v567 = vpop.f32.mrb[0].mxu0
  %v568 = vpop.f32.mrb[0].mxu0
  %v569 = vadd.f32 %v377, %v568
  %v570 = vpop.f32.mrb[0].mxu0
  %571 = vmatprep.mubr.bf16.mxu0 0
  %572 = vmatmul.mubr.bf16.gmra.mrb[0].mxu0 %v354
  %v573 = vpop.f32.mrb[0].mxu0
  %v574 = vadd.f32 %v377, %v573
  %v575 = vpop.f32.mrb[0].mxu0
  %v576 = vpop.f32.mrb[0].mxu0
  %v577 = vadd.f32 %v377, %v576
  %v578 = vpop.f32.mrb[0].mxu0
  %579 = vmatprep.mubr.bf16.mxu0 0
  %580 = vmatmul.mubr.bf16.gmra.mrb[0].mxu0 %v355
  %v581 = vpop.f32.mrb[0].mxu0
  %v582 = vadd.f32 %v377, %v581
  %v583 = vpop.f32.mrb[0].mxu0
  %v584 = vpop.f32.mrb[0].mxu0
  %v585 = vadd.f32 %v377, %v584
  %v586 = vpop.f32.mrb[0].mxu0
  %587 = vdwg.mxu0
  %v588 = vmax.f32 %v462, 0.0
  %v589 = vmax.f32 %v465, 0.0
  %v590 = vmax.f32 %v470, 0.0
  %v591 = vmax.f32 %v473, 0.0
  %v592 = vmax.f32 %v478, 0.0
  %v593 = vmax.f32 %v481, 0.0
  %v594 = vmax.f32 %v486, 0.0
  %v595 = vmax.f32 %v489, 0.0
  %v596 = vmax.f32 %v494, 0.0
  %v597 = vmax.f32 %v497, 0.0
  %v598 = vmax.f32 %v502, 0.0
  %v599 = vmax.f32 %v505, 0.0
  %v600 = vmax.f32 %v510, 0.0
  %v601 = vmax.f32 %v513, 0.0
  %v602 = vmax.f32 %v518, 0.0
  %v603 = vmax.f32 %v521, 0.0
  %v604 = vmax.f32 %v526, 0.0
  %v605 = vmax.f32 %v529, 0.0
  %v606 = vmax.f32 %v534, 0.0
  %v607 = vmax.f32 %v537, 0.0
  %v608 = vmax.f32 %v542, 0.0
  %v609 = vmax.f32 %v545, 0.0
  %v610 = vmax.f32 %v550, 0.0
  %v611 = vmax.f32 %v553, 0.0
  %v612 = vmax.f32 %v558, 0.0
  %v613 = vmax.f32 %v561, 0.0
  %v614 = vmax.f32 %v566, 0.0
  %v615 = vmax.f32 %v569, 0.0
  %v616 = vmax.f32 %v574, 0.0
  %v617 = vmax.f32 %v577, 0.0
  %v618 = vmax.f32 %v582, 0.0
  %v619 = vmax.f32 %v585, 0.0
  %v620 = vpack.c.bf16 %v589, %v588
  %v621 = vpack.c.bf16 %v591, %v590
  %v622 = vpack.c.bf16 %v593, %v592
  %v623 = vpack.c.bf16 %v595, %v594
  %v624 = vpack.c.bf16 %v597, %v596
  %v625 = vpack.c.bf16 %v599, %v598
  %v626 = vpack.c.bf16 %v601, %v600
  %v627 = vpack.c.bf16 %v603, %v602
  %v628 = vpack.c.bf16 %v605, %v604
  %v629 = vpack.c.bf16 %v607, %v606
  %v630 = vpack.c.bf16 %v609, %v608
  %v631 = vpack.c.bf16 %v611, %v610
  %v632 = vpack.c.bf16 %v613, %v612
  %v633 = vpack.c.bf16 %v615, %v614
  %v634 = vpack.c.bf16 %v617, %v616
  %v635 = vpack.c.bf16 %v619, %v618
  %v636 = vld [vmem:[%s5] sm:$0xf]
  %v637 = vld [vmem:[%s5 + $0x4] sm:$0xf]
  %v638 = vld [vmem:[%s5 + $0x8] sm:$0xf]
  %v639 = vld [vmem:[%s5 + $0xc] sm:$0xf]
  %v640 = vld [vmem:[%s5 + $0x10] sm:$0xf]
  %v641 = vld [vmem:[%s5 + $0x14] sm:$0xf]
  %v642 = vld [vmem:[%s5 + $0x18] sm:$0xf]
  %v643 = vld [vmem:[%s5 + $0x1c] sm:$0xf]
  %v644 = vld [vmem:[%s5 + $0x20] sm:$0xf]
  %v645 = vld [vmem:[%s5 + $0x24] sm:$0xf]
  %v646 = vld [vmem:[%s5 + $0x28] sm:$0xf]
  %v647 = vld [vmem:[%s5 + $0x2c] sm:$0xf]
  %v648 = vld [vmem:[%s5 + $0x30] sm:$0xf]
  %v649 = vld [vmem:[%s5 + $0x34] sm:$0xf]
  %v650 = vld [vmem:[%s5 + $0x38] sm:$0xf]
  %v651 = vld [vmem:[%s5 + $0x3c] sm:$0xf]
  %v652 = vld [vmem:[%s6] sm:$0x1]
  %v654 = vlaneseq
  %v655 = vshrl.u32 %v654, 7
  %v656 = vsub.s32 0, %v655
  %v657 = vrot.slane %v652, %v656
  %v675 = vunpack.c.l.b16 %v636
  %v676 = vunpack.c.l.b16 %v637
  %v677 = vunpack.c.l.b16 %v638
  %v678 = vunpack.c.l.b16 %v639
  %v679 = vunpack.c.l.b16 %v640
  %v680 = vunpack.c.l.b16 %v641
  %v681 = vunpack.c.l.b16 %v642
  %v682 = vunpack.c.l.b16 %v643
  %v683 = vunpack.c.l.b16 %v644
  %v684 = vunpack.c.l.b16 %v645
  %v685 = vunpack.c.l.b16 %v646
  %v686 = vunpack.c.l.b16 %v647
  %v687 = vunpack.c.l.b16 %v648
  %v688 = vunpack.c.l.b16 %v649
  %v689 = vunpack.c.l.b16 %v650
  %v690 = vunpack.c.l.b16 %v651
  %v691 = vpack.c.b16 %v676, %v675
  %v692 = vpack.c.b16 %v678, %v677
  %v693 = vpack.c.b16 %v680, %v679
  %v694 = vpack.c.b16 %v682, %v681
  %v695 = vpack.c.b16 %v684, %v683
  %v696 = vpack.c.b16 %v686, %v685
  %v697 = vpack.c.b16 %v688, %v687
  %v698 = vpack.c.b16 %v690, %v689
  %707 = vmatprep.subr.bf16.mxu0 0
  %708 = vmatpush1.bf16.msra.mxu0 %v691
  %709 = vmatprep.subr.bf16.mxu0 0
  %710 = vmatpush1.bf16.msra.mxu0 %v692
  %711 = vmatprep.subr.bf16.mxu0 0
  %712 = vmatpush1.bf16.msra.mxu0 %v693
  %713 = vmatprep.subr.bf16.mxu0 0
  %714 = vmatpush1.bf16.msra.mxu0 %v694
  %715 = vmatprep.subr.bf16.mxu0 0
  %716 = vmatpush1.bf16.msra.mxu0 %v695
  %717 = vmatprep.subr.bf16.mxu0 0
  %718 = vmatpush1.bf16.msra.mxu0 %v696
  %719 = vmatprep.subr.bf16.mxu0 0
  %720 = vmatpush1.bf16.msra.mxu0 %v697
  %721 = vmatprep.subr.bf16.mxu0 0
  %722 = vmatpush1.bf16.msra.mxu0 %v698
  %723 = vmatprep.subr.bf16.mxu0 0
  %724 = vmatpush1.bf16.msra.mxu0 0
  %725 = vmatprep.subr.bf16.mxu0 0
  %726 = vmatpush1.bf16.msra.mxu0 0
  %727 = vmatprep.subr.bf16.mxu0 0
  %728 = vmatpush1.bf16.msra.mxu0 0
  %729 = vmatprep.subr.bf16.mxu0 0
  %730 = vmatpush1.bf16.msra.mxu0 0
  %731 = vmatprep.subr.bf16.mxu0 0
  %732 = vmatpush1.bf16.msra.mxu0 0
  %733 = vmatprep.subr.bf16.mxu0 0
  %734 = vmatpush1.bf16.msra.mxu0 0
  %735 = vmatprep.subr.bf16.mxu0 0
  %736 = vmatpush1.bf16.msra.mxu0 0
  %737 = vmatprep.subr.bf16.mxu0 0
  %738 = vmatpush1.bf16.msra.mxu0 0
  %739 = vmatprep.mubr.bf16.mxu0 0
  %740 = vmatmul.mubr.bf16.gmra.mrb[0].mxu0 %v620
  %v741 = vpop.f32.mrb[0].mxu0
  %v742 = vadd.f32 %v657, %v741
  %v743 = vpop.f32.mrb[0].mxu0
  %v744 = vpop.f32.mrb[0].mxu0
  %v745 = vadd.f32 %v657, %v744
  %v746 = vpop.f32.mrb[0].mxu0
  %747 = vmatprep.mubr.bf16.mxu0 0
  %748 = vmatmul.mubr.bf16.gmra.mrb[0].mxu0 %v621
  %v749 = vpop.f32.mrb[0].mxu0
  %v750 = vadd.f32 %v657, %v749
  %v751 = vpop.f32.mrb[0].mxu0
  %v752 = vpop.f32.mrb[0].mxu0
  %v753 = vadd.f32 %v657, %v752
  %v754 = vpop.f32.mrb[0].mxu0
  %755 = vmatprep.mubr.bf16.mxu0 0
  %756 = vmatmul.mubr.bf16.gmra.mrb[0].mxu0 %v622
  %v757 = vpop.f32.mrb[0].mxu0
  %v758 = vadd.f32 %v657, %v757
  %v759 = vpop.f32.mrb[0].mxu0
  %v760 = vpop.f32.mrb[0].mxu0
  %v761 = vadd.f32 %v657, %v760
  %v762 = vpop.f32.mrb[0].mxu0
  %763 = vmatprep.mubr.bf16.mxu0 0
  %764 = vmatmul.mubr.bf16.gmra.mrb[0].mxu0 %v623
  %v765 = vpop.f32.mrb[0].mxu0
  %v766 = vadd.f32 %v657, %v765
  %v767 = vpop.f32.mrb[0].mxu0
  %v768 = vpop.f32.mrb[0].mxu0
  %v769 = vadd.f32 %v657, %v768
  %v770 = vpop.f32.mrb[0].mxu0
  %771 = vmatprep.mubr.bf16.mxu0 0
  %772 = vmatmul.mubr.bf16.gmra.mrb[0].mxu0 %v624
  %v773 = vpop.f32.mrb[0].mxu0
  %v774 = vadd.f32 %v657, %v773
  %v775 = vpop.f32.mrb[0].mxu0
  %v776 = vpop.f32.mrb[0].mxu0
  %v777 = vadd.f32 %v657, %v776
  %v778 = vpop.f32.mrb[0].mxu0
  %779 = vmatprep.mubr.bf16.mxu0 0
  %780 = vmatmul.mubr.bf16.gmra.mrb[0].mxu0 %v625
  %v781 = vpop.f32.mrb[0].mxu0
  %v782 = vadd.f32 %v657, %v781
  %v783 = vpop.f32.mrb[0].mxu0
  %v784 = vpop.f32.mrb[0].mxu0
  %v785 = vadd.f32 %v657, %v784
  %v786 = vpop.f32.mrb[0].mxu0
  %787 = vmatprep.mubr.bf16.mxu0 0
  %788 = vmatmul.mubr.bf16.gmra.mrb[0].mxu0 %v626
  %v789 = vpop.f32.mrb[0].mxu0
  %v790 = vadd.f32 %v657, %v789
  %v791 = vpop.f32.mrb[0].mxu0
  %v792 = vpop.f32.mrb[0].mxu0
  %v793 = vadd.f32 %v657, %v792
  %v794 = vpop.f32.mrb[0].mxu0
  %795 = vmatprep.mubr.bf16.mxu0 0
  %796 = vmatmul.mubr.bf16.gmra.mrb[0].mxu0 %v627
  %v797 = vpop.f32.mrb[0].mxu0
  %v798 = vadd.f32 %v657, %v797
  %v799 = vpop.f32.mrb[0].mxu0
  %v800 = vpop.f32.mrb[0].mxu0
  %v801 = vadd.f32 %v657, %v800
  %v802 = vpop.f32.mrb[0].mxu0
  %803 = vmatprep.mubr.bf16.mxu0 0
  %804 = vmatmul.mubr.bf16.gmra.mrb[0].mxu0 %v628
  %v805 = vpop.f32.mrb[0].mxu0
  %v806 = vadd.f32 %v657, %v805
  %v807 = vpop.f32.mrb[0].mxu0
  %v808 = vpop.f32.mrb[0].mxu0
  %v809 = vadd.f32 %v657, %v808
  %v810 = vpop.f32.mrb[0].mxu0
  %811 = vmatprep.mubr.bf16.mxu0 0
  %812 = vmatmul.mubr.bf16.gmra.mrb[0].mxu0 %v629
  %v813 = vpop.f32.mrb[0].mxu0
  %v814 = vadd.f32 %v657, %v813
  %v815 = vpop.f32.mrb[0].mxu0
  %v816 = vpop.f32.mrb[0].mxu0
  %v817 = vadd.f32 %v657, %v816
  %v818 = vpop.f32.mrb[0].mxu0
  %819 = vmatprep.mubr.bf16.mxu0 0
  %820 = vmatmul.mubr.bf16.gmra.mrb[0].mxu0 %v630
  %v821 = vpop.f32.mrb[0].mxu0
  %v822 = vadd.f32 %v657, %v821
  %v823 = vpop.f32.mrb[0].mxu0
  %v824 = vpop.f32.mrb[0].mxu0
  %v825 = vadd.f32 %v657, %v824
  %v826 = vpop.f32.mrb[0].mxu0
  %827 = vmatprep.mubr.bf16.mxu0 0
  %828 = vmatmul.mubr.bf16.gmra.mrb[0].mxu0 %v631
  %v829 = vpop.f32.mrb[0].mxu0
  %v830 = vadd.f32 %v657, %v829
  %v831 = vpop.f32.mrb[0].mxu0
  %v832 = vpop.f32.mrb[0].mxu0
  %v833 = vadd.f32 %v657, %v832
  %v834 = vpop.f32.mrb[0].mxu0
  %835 = vmatprep.mubr.bf16.mxu0 0
  %836 = vmatmul.mubr.bf16.gmra.mrb[0].mxu0 %v632
  %v837 = vpop.f32.mrb[0].mxu0
  %v838 = vadd.f32 %v657, %v837
  %v839 = vpop.f32.mrb[0].mxu0
  %v840 = vpop.f32.mrb[0].mxu0
  %v841 = vadd.f32 %v657, %v840
  %v842 = vpop.f32.mrb[0].mxu0
  %843 = vmatprep.mubr.bf16.mxu0 0
  %844 = vmatmul.mubr.bf16.gmra.mrb[0].mxu0 %v633
  %v845 = vpop.f32.mrb[0].mxu0
  %v846 = vadd.f32 %v657, %v845
  %v847 = vpop.f32.mrb[0].mxu0
  %v848 = vpop.f32.mrb[0].mxu0
  %v849 = vadd.f32 %v657, %v848
  %v850 = vpop.f32.mrb[0].mxu0
  %851 = vmatprep.mubr.bf16.mxu0 0
  %852 = vmatmul.mubr.bf16.gmra.mrb[0].mxu0 %v634
  %v853 = vpop.f32.mrb[0].mxu0
  %v854 = vadd.f32 %v657, %v853
  %v855 = vpop.f32.mrb[0].mxu0
  %v856 = vpop.f32.mrb[0].mxu0
  %v857 = vadd.f32 %v657, %v856
  %v858 = vpop.f32.mrb[0].mxu0
  %859 = vmatprep.mubr.bf16.mxu0 0
  %860 = vmatmul.mubr.bf16.gmra.mrb[0].mxu0 %v635
  %v861 = vpop.f32.mrb[0].mxu0
  %v862 = vadd.f32 %v657, %v861
  %v863 = vpop.f32.mrb[0].mxu0
  %v864 = vpop.f32.mrb[0].mxu0
  %v865 = vadd.f32 %v657, %v864
  %v866 = vpop.f32.mrb[0].mxu0
  %867 = vdwg.mxu0
  %vm868 = vcmask 130048
  %869 = vst.msk [vmem:[%s7] sm:$0xff] %vm868, %v742
  %870 = vst.msk [vmem:[%s7 + $0x8] sm:$0xff] %vm868, %v745
  %871 = vst.msk [vmem:[%s7 + $0x10] sm:$0xff] %vm868, %v750
  %872 = vst.msk [vmem:[%s7 + $0x18] sm:$0xff] %vm868, %v753
  %873 = vst.msk [vmem:[%s7 + $0x20] sm:$0xff] %vm868, %v758
  %874 = vst.msk [vmem:[%s7 + $0x28] sm:$0xff] %vm868, %v761
  %875 = vst.msk [vmem:[%s7 + $0x30] sm:$0xff] %vm868, %v766
  %876 = vst.msk [vmem:[%s7 + $0x38] sm:$0xff] %vm868, %v769
  %877 = vst.msk [vmem:[%s7 + $0x40] sm:$0xff] %vm868, %v774
  %878 = vst.msk [vmem:[%s7 + $0x48] sm:$0xff] %vm868, %v777
  %879 = vst.msk [vmem:[%s7 + $0x50] sm:$0xff] %vm868, %v782
  %880 = vst.msk [vmem:[%s7 + $0x58] sm:$0xff] %vm868, %v785
  %881 = vst.msk [vmem:[%s7 + $0x60] sm:$0xff] %vm868, %v790
  %882 = vst.msk [vmem:[%s7 + $0x68] sm:$0xff] %vm868, %v793
  %883 = vst.msk [vmem:[%s7 + $0x70] sm:$0xff] %vm868, %v798
  %884 = vst.msk [vmem:[%s7 + $0x78] sm:$0xff] %vm868, %v801
  %885 = vst.msk [vmem:[%s7 + $0x80] sm:$0xff] %vm868, %v806
  %886 = vst.msk [vmem:[%s7 + $0x88] sm:$0xff] %vm868, %v809
  %887 = vst.msk [vmem:[%s7 + $0x90] sm:$0xff] %vm868, %v814
  %888 = vst.msk [vmem:[%s7 + $0x98] sm:$0xff] %vm868, %v817
  %889 = vst.msk [vmem:[%s7 + $0xa0] sm:$0xff] %vm868, %v822
  %890 = vst.msk [vmem:[%s7 + $0xa8] sm:$0xff] %vm868, %v825
  %891 = vst.msk [vmem:[%s7 + $0xb0] sm:$0xff] %vm868, %v830
  %892 = vst.msk [vmem:[%s7 + $0xb8] sm:$0xff] %vm868, %v833
  %893 = vst.msk [vmem:[%s7 + $0xc0] sm:$0xff] %vm868, %v838
  %894 = vst.msk [vmem:[%s7 + $0xc8] sm:$0xff] %vm868, %v841
  %895 = vst.msk [vmem:[%s7 + $0xd0] sm:$0xff] %vm868, %v846
  %896 = vst.msk [vmem:[%s7 + $0xd8] sm:$0xff] %vm868, %v849
  %897 = vst.msk [vmem:[%s7 + $0xe0] sm:$0xff] %vm868, %v854
  %898 = vst.msk [vmem:[%s7 + $0xe8] sm:$0xff] %vm868, %v857
  %899 = vst.msk [vmem:[%s7 + $0xf0] sm:$0xff] %vm868, %v862
  %900 = vst.msk [vmem:[%s7 + $0xf8] sm:$0xff] %vm868, %v865
  // Predicated region
  $region30: #{tpu_custom_call.1} parent=0 // pred_check
    _
  $region31: #{tpu_custom_call.1} parent=0 // pred_check_branch
    %902 = sbr.rel (0) target = $region33
  $region32: #{tpu_custom_call.1} parent=0 // pred_region
    _
  $region33: #{tpu_custom_call.1} parent=0 // pred_fallthru
    _
  // Predicated region
  $region34: #{tpu_custom_call.1} parent=0 // pred_check
    _
  $region35: #{tpu_custom_call.1} parent=0 // pred_check_branch
    %904 = sbr.rel (0) target = $region37
  $region36: #{tpu_custom_call.1} parent=0 // pred_region
    _
  $region37: #{tpu_custom_call.1} parent=0 // pred_fallthru
    _

// kernel: tpu_custom_call.1
$region0: #{tpu_custom_call.1}
  #allocation0 [shape = 'u32[]', space=smem, size = 0x4, offset = 0x4, fixed_abs, tag = 'smem constant byte address 0x4 - core index']
  #allocation1 [shape = 'u32[144,128]{1,0:T(1,128)}', space=vmem, size = 0x12000, scoped, tag = 'internal scratch']
  %s0 = inlined_call_operand.vmem [shape: f32[256,32], index: 0, kind: input, shape index: {}]
  %s1 = inlined_call_operand.vmem [shape: bf16[32,128], index: 1, kind: input, shape index: {}]
  %s2 = inlined_call_operand.vmem [shape: f32[1,128], index: 2, kind: input, shape index: {}]
  %s3 = inlined_call_operand.vmem [shape: bf16[128,128], index: 3, kind: input, shape index: {}]
  %s4 = inlined_call_operand.vmem [shape: f32[1,128], index: 4, kind: input, shape index: {}]
  %s5 = inlined_call_operand.vmem [shape: bf16[128,16], index: 5, kind: input, shape index: {}]
  %s6 = inlined_call_operand.vmem [shape: f32[1,16], index: 6, kind: input, shape index: {}]
  %s7 = inlined_call_operand.vmem [shape: f32[256,16], index: 7, kind: output, shape index: {}]
  %s8 = sld [smem:[#allocation0]]
  $region38: #{tpu_custom_call.1} parent=0
    _
  %s10 = ssub.s32 1, %s8
  %s11 = scalar_select 0, %s10, %s8
  // Predicated region
  $region2: #{tpu_custom_call.1} parent=0 // pred_check
    _
  $region3: #{tpu_custom_call.1} parent=0 // pred_check_branch
    %13 = sbr.rel (0) target = $region5
  $region4: #{tpu_custom_call.1} parent=0 // pred_region
    _
  $region5: #{tpu_custom_call.1} parent=0 // pred_fallthru
    _
  // Predicated region
  $region6: #{tpu_custom_call.1} parent=0 // pred_check
    _
  $region7: #{tpu_custom_call.1} parent=0 // pred_check_branch
    %15 = sbr.rel (0) target = $region9
  $region8: #{tpu_custom_call.1} parent=0 // pred_region
    _
  $region9: #{tpu_custom_call.1} parent=0 // pred_fallthru
    _
  // Predicated region
  $region10: #{tpu_custom_call.1} parent=0 // pred_check
    _
  $region11: #{tpu_custom_call.1} parent=0 // pred_check_branch
    %17 = sbr.rel (0) target = $region13
  $region12: #{tpu_custom_call.1} parent=0 // pred_region
    _
  $region13: #{tpu_custom_call.1} parent=0 // pred_fallthru
    _
  // Predicated region
  $region14: #{tpu_custom_call.1} parent=0 // pred_check
    _
  $region15: #{tpu_custom_call.1} parent=0 // pred_check_branch
    %19 = sbr.rel (0) target = $region17
  $region16: #{tpu_custom_call.1} parent=0 // pred_region
    _
  $region17: #{tpu_custom_call.1} parent=0 // pred_fallthru
    _
  // Predicated region
  $region18: #{tpu_custom_call.1} parent=0 // pred_check
    _
  $region19: #{tpu_custom_call.1} parent=0 // pred_check_branch
    %21 = sbr.rel (0) target = $region21
  $region20: #{tpu_custom_call.1} parent=0 // pred_region
    _
  $region21: #{tpu_custom_call.1} parent=0 // pred_fallthru
    _
  // Predicated region
  $region22: #{tpu_custom_call.1} parent=0 // pred_check
    _
  $region23: #{tpu_custom_call.1} parent=0 // pred_check_branch
    %23 = sbr.rel (0) target = $region25
  $region24: #{tpu_custom_call.1} parent=0 // pred_region
    _
  $region25: #{tpu_custom_call.1} parent=0 // pred_fallthru
    _
  // Predicated region
  $region26: #{tpu_custom_call.1} parent=0 // pred_check
    _
  $region27: #{tpu_custom_call.1} parent=0 // pred_check_branch
    %25 = sbr.rel (0) target = $region29
  $region28: #{tpu_custom_call.1} parent=0 // pred_region
    _
  $region29: #{tpu_custom_call.1} parent=0 // pred_fallthru
    _
  %v27 = vld [vmem:[%s0] sm:$0xff]
  %v28 = vld [vmem:[%s0 + $0x8] sm:$0xff]
  %v29 = vld [vmem:[%s0 + $0x10] sm:$0xff]
  %v30 = vld [vmem:[%s0 + $0x18] sm:$0xff]
  %v31 = vld [vmem:[%s0 + $0x20] sm:$0xff]
  %v32 = vld [vmem:[%s0 + $0x28] sm:$0xff]
  %v33 = vld [vmem:[%s0 + $0x30] sm:$0xff]
  %v34 = vld [vmem:[%s0 + $0x38] sm:$0xff]
  %v35 = vld [vmem:[%s0 + $0x40] sm:$0xff]
  %v36 = vld [vmem:[%s0 + $0x48] sm:$0xff]
  %v37 = vld [vmem:[%s0 + $0x50] sm:$0xff]
  %v38 = vld [vmem:[%s0 + $0x58] sm:$0xff]
  %v39 = vld [vmem:[%s0 + $0x60] sm:$0xff]
  %v40 = vld [vmem:[%s0 + $0x68] sm:$0xff]
  %v41 = vld [vmem:[%s0 + $0x70] sm:$0xff]
  %v42 = vld [vmem:[%s0 + $0x78] sm:$0xff]
  %v43 = vld [vmem:[%s0 + $0x80] sm:$0xff]
  %v44 = vld [vmem:[%s0 + $0x88] sm:$0xff]
  %v45 = vld [vmem:[%s0 + $0x90] sm:$0xff]
  %v46 = vld [vmem:[%s0 + $0x98] sm:$0xff]
  %v47 = vld [vmem:[%s0 + $0xa0] sm:$0xff]
  %v48 = vld [vmem:[%s0 + $0xa8] sm:$0xff]
  %v49 = vld [vmem:[%s0 + $0xb0] sm:$0xff]
  %v50 = vld [vmem:[%s0 + $0xb8] sm:$0xff]
  %v51 = vld [vmem:[%s0 + $0xc0] sm:$0xff]
  %v52 = vld [vmem:[%s0 + $0xc8] sm:$0xff]
  %v53 = vld [vmem:[%s0 + $0xd0] sm:$0xff]
  %v54 = vld [vmem:[%s0 + $0xd8] sm:$0xff]
  %v55 = vld [vmem:[%s0 + $0xe0] sm:$0xff]
  %v56 = vld [vmem:[%s0 + $0xe8] sm:$0xff]
  %v57 = vld [vmem:[%s0 + $0xf0] sm:$0xff]
  %v58 = vld [vmem:[%s0 + $0xf8] sm:$0xff]
  %v59 = vpack.c.bf16 %v28, %v27
  %v60 = vpack.c.bf16 %v30, %v29
  %v61 = vpack.c.bf16 %v32, %v31
  %v62 = vpack.c.bf16 %v34, %v33
  %v63 = vpack.c.bf16 %v36, %v35
  %v64 = vpack.c.bf16 %v38, %v37
  %v65 = vpack.c.bf16 %v40, %v39
  %v66 = vpack.c.bf16 %v42, %v41
  %v67 = vpack.c.bf16 %v44, %v43
  %v68 = vpack.c.bf16 %v46, %v45
  %v69 = vpack.c.bf16 %v48, %v47
  %v70 = vpack.c.bf16 %v50, %v49
  %v71 = vpack.c.bf16 %v52, %v51
  %v72 = vpack.c.bf16 %v54, %v53
  %v73 = vpack.c.bf16 %v56, %v55
  %v74 = vpack.c.bf16 %v58, %v57
  %v75 = vld [vmem:[%s1] sm:$0xf]
  %v76 = vld [vmem:[%s1 + $0x4] sm:$0xf]
  %v77 = vld [vmem:[%s1 + $0x8] sm:$0xf]
  %v78 = vld [vmem:[%s1 + $0xc] sm:$0xf]
  %v79 = vld [vmem:[%s2] sm:$0x1]
  %v81 = vlaneseq
  %v82 = vshrl.u32 %v81, 7
  %v83 = vsub.s32 0, %v82
  %v84 = vrot.slane %v79, %v83
  %v90 = vunpack.c.l.b16 %v75
  %v91 = vunpack.c.l.b16 %v76
  %v92 = vunpack.c.l.b16 %v77
  %v93 = vunpack.c.l.b16 %v78
  %v94 = vpack.c.b16 %v91, %v90
  %v95 = vpack.c.b16 %v93, %v92
  %vm98 = vcmask 261120
  %v100 = vsel %vm98, %v59, 0
  %v103 = vsel %vm98, %v60, 0
  %v106 = vsel %vm98, %v61, 0
  %v109 = vsel %vm98, %v62, 0
  %v112 = vsel %vm98, %v63, 0
  %v115 = vsel %vm98, %v64, 0
  %v118 = vsel %vm98, %v65, 0
  %v121 = vsel %vm98, %v66, 0
  %v124 = vsel %vm98, %v67, 0
  %v127 = vsel %vm98, %v68, 0
  %v130 = vsel %vm98, %v69, 0
  %v133 = vsel %vm98, %v70, 0
  %v136 = vsel %vm98, %v71, 0
  %v139 = vsel %vm98, %v72, 0
  %v142 = vsel %vm98, %v73, 0
  %v145 = vsel %vm98, %v74, 0
  %147 = vmatprep.subr.bf16.mxu0 0
  %148 = vmatpush1.bf16.msra.mxu0 %v94
  %149 = vmatprep.subr.bf16.mxu0 0
  %150 = vmatpush1.bf16.msra.mxu0 %v95
  %151 = vmatprep.subr.bf16.mxu0 0
  %152 = vmatpush1.bf16.msra.mxu0 0
  %153 = vmatprep.subr.bf16.mxu0 0
  %154 = vmatpush1.bf16.msra.mxu0 0
  %155 = vmatprep.subr.bf16.mxu0 0
  %156 = vmatpush1.bf16.msra.mxu0 0
  %157 = vmatprep.subr.bf16.mxu0 0
  %158 = vmatpush1.bf16.msra.mxu0 0
  %159 = vmatprep.subr.bf16.mxu0 0
  %160 = vmatpush1.bf16.msra.mxu0 0
  %161 = vmatprep.subr.bf16.mxu0 0
  %162 = vmatpush1.bf16.msra.mxu0 0
  %163 = vmatprep.subr.bf16.mxu0 0
  %164 = vmatpush1.bf16.msra.mxu0 0
  %165 = vmatprep.subr.bf16.mxu0 0
  %166 = vmatpush1.bf16.msra.mxu0 0
  %167 = vmatprep.subr.bf16.mxu0 0
  %168 = vmatpush1.bf16.msra.mxu0 0
  %169 = vmatprep.subr.bf16.mxu0 0
  %170 = vmatpush1.bf16.msra.mxu0 0
  %171 = vmatprep.subr.bf16.mxu0 0
  %172 = vmatpush1.bf16.msra.mxu0 0
  %173 = vmatprep.subr.bf16.mxu0 0
  %174 = vmatpush1.bf16.msra.mxu0 0
  %175 = vmatprep.subr.bf16.mxu0 0
  %176 = vmatpush1.bf16.msra.mxu0 0
  %177 = vmatprep.subr.bf16.mxu0 0
  %178 = vmatpush1.bf16.msra.mxu0 0
  %179 = vmatprep.mubr.bf16.mxu0 0
  %180 = vmatmul.mubr.bf16.gmra.mrb[0].mxu0 %v100
  %v181 = vpop.f32.mrb[0].mxu0
  %v182 = vadd.f32 %v84, %v181
  %v183 = vpop.f32.mrb[0].mxu0
  %v184 = vpop.f32.mrb[0].mxu0
  %v185 = vadd.f32 %v84, %v184
  %v186 = vpop.f32.mrb[0].mxu0
  %187 = vmatprep.mubr.bf16.mxu0 0
  %188 = vmatmul.mubr.bf16.gmra.mrb[0].mxu0 %v103
  %v189 = vpop.f32.mrb[0].mxu0
  %v190 = vadd.f32 %v84, %v189
  %v191 = vpop.f32.mrb[0].mxu0
  %v192 = vpop.f32.mrb[0].mxu0
  %v193 = vadd.f32 %v84, %v192
  %v194 = vpop.f32.mrb[0].mxu0
  %195 = vmatprep.mubr.bf16.mxu0 0
  %196 = vmatmul.mubr.bf16.gmra.mrb[0].mxu0 %v106
  %v197 = vpop.f32.mrb[0].mxu0
  %v198 = vadd.f32 %v84, %v197
  %v199 = vpop.f32.mrb[0].mxu0
  %v200 = vpop.f32.mrb[0].mxu0
  %v201 = vadd.f32 %v84, %v200
  %v202 = vpop.f32.mrb[0].mxu0
  %203 = vmatprep.mubr.bf16.mxu0 0
  %204 = vmatmul.mubr.bf16.gmra.mrb[0].mxu0 %v109
  %v205 = vpop.f32.mrb[0].mxu0
  %v206 = vadd.f32 %v84, %v205
  %v207 = vpop.f32.mrb[0].mxu0
  %v208 = vpop.f32.mrb[0].mxu0
  %v209 = vadd.f32 %v84, %v208
  %v210 = vpop.f32.mrb[0].mxu0
  %211 = vmatprep.mubr.bf16.mxu0 0
  %212 = vmatmul.mubr.bf16.gmra.mrb[0].mxu0 %v112
  %v213 = vpop.f32.mrb[0].mxu0
  %v214 = vadd.f32 %v84, %v213
  %v215 = vpop.f32.mrb[0].mxu0
  %v216 = vpop.f32.mrb[0].mxu0
  %v217 = vadd.f32 %v84, %v216
  %v218 = vpop.f32.mrb[0].mxu0
  %219 = vmatprep.mubr.bf16.mxu0 0
  %220 = vmatmul.mubr.bf16.gmra.mrb[0].mxu0 %v115
  %v221 = vpop.f32.mrb[0].mxu0
  %v222 = vadd.f32 %v84, %v221
  %v223 = vpop.f32.mrb[0].mxu0
  %v224 = vpop.f32.mrb[0].mxu0
  %v225 = vadd.f32 %v84, %v224
  %v226 = vpop.f32.mrb[0].mxu0
  %227 = vmatprep.mubr.bf16.mxu0 0
  %228 = vmatmul.mubr.bf16.gmra.mrb[0].mxu0 %v118
  %v229 = vpop.f32.mrb[0].mxu0
  %v230 = vadd.f32 %v84, %v229
  %v231 = vpop.f32.mrb[0].mxu0
  %v232 = vpop.f32.mrb[0].mxu0
  %v233 = vadd.f32 %v84, %v232
  %v234 = vpop.f32.mrb[0].mxu0
  %235 = vmatprep.mubr.bf16.mxu0 0
  %236 = vmatmul.mubr.bf16.gmra.mrb[0].mxu0 %v121
  %v237 = vpop.f32.mrb[0].mxu0
  %v238 = vadd.f32 %v84, %v237
  %v239 = vpop.f32.mrb[0].mxu0
  %v240 = vpop.f32.mrb[0].mxu0
  %v241 = vadd.f32 %v84, %v240
  %v242 = vpop.f32.mrb[0].mxu0
  %243 = vmatprep.mubr.bf16.mxu0 0
  %244 = vmatmul.mubr.bf16.gmra.mrb[0].mxu0 %v124
  %v245 = vpop.f32.mrb[0].mxu0
  %v246 = vadd.f32 %v84, %v245
  %v247 = vpop.f32.mrb[0].mxu0
  %v248 = vpop.f32.mrb[0].mxu0
  %v249 = vadd.f32 %v84, %v248
  %v250 = vpop.f32.mrb[0].mxu0
  %251 = vmatprep.mubr.bf16.mxu0 0
  %252 = vmatmul.mubr.bf16.gmra.mrb[0].mxu0 %v127
  %v253 = vpop.f32.mrb[0].mxu0
  %v254 = vadd.f32 %v84, %v253
  %v255 = vpop.f32.mrb[0].mxu0
  %v256 = vpop.f32.mrb[0].mxu0
  %v257 = vadd.f32 %v84, %v256
  %v258 = vpop.f32.mrb[0].mxu0
  %259 = vmatprep.mubr.bf16.mxu0 0
  %260 = vmatmul.mubr.bf16.gmra.mrb[0].mxu0 %v130
  %v261 = vpop.f32.mrb[0].mxu0
  %v262 = vadd.f32 %v84, %v261
  %v263 = vpop.f32.mrb[0].mxu0
  %v264 = vpop.f32.mrb[0].mxu0
  %v265 = vadd.f32 %v84, %v264
  %v266 = vpop.f32.mrb[0].mxu0
  %267 = vmatprep.mubr.bf16.mxu0 0
  %268 = vmatmul.mubr.bf16.gmra.mrb[0].mxu0 %v133
  %v269 = vpop.f32.mrb[0].mxu0
  %v270 = vadd.f32 %v84, %v269
  %v271 = vpop.f32.mrb[0].mxu0
  %v272 = vpop.f32.mrb[0].mxu0
  %v273 = vadd.f32 %v84, %v272
  %v274 = vpop.f32.mrb[0].mxu0
  %275 = vmatprep.mubr.bf16.mxu0 0
  %276 = vmatmul.mubr.bf16.gmra.mrb[0].mxu0 %v136
  %v277 = vpop.f32.mrb[0].mxu0
  %v278 = vadd.f32 %v84, %v277
  %v279 = vpop.f32.mrb[0].mxu0
  %v280 = vpop.f32.mrb[0].mxu0
  %v281 = vadd.f32 %v84, %v280
  %v282 = vpop.f32.mrb[0].mxu0
  %283 = vmatprep.mubr.bf16.mxu0 0
  %284 = vmatmul.mubr.bf16.gmra.mrb[0].mxu0 %v139
  %v285 = vpop.f32.mrb[0].mxu0
  %v286 = vadd.f32 %v84, %v285
  %v287 = vpop.f32.mrb[0].mxu0
  %v288 = vpop.f32.mrb[0].mxu0
  %v289 = vadd.f32 %v84, %v288
  %v290 = vpop.f32.mrb[0].mxu0
  %291 = vmatprep.mubr.bf16.mxu0 0
  %292 = vmatmul.mubr.bf16.gmra.mrb[0].mxu0 %v142
  %v293 = vpop.f32.mrb[0].mxu0
  %v294 = vadd.f32 %v84, %v293
  %v295 = vpop.f32.mrb[0].mxu0
  %v296 = vpop.f32.mrb[0].mxu0
  %v297 = vadd.f32 %v84, %v296
  %v298 = vpop.f32.mrb[0].mxu0
  %299 = vmatprep.mubr.bf16.mxu0 0
  %300 = vmatmul.mubr.bf16.gmra.mrb[0].mxu0 %v145
  %v301 = vpop.f32.mrb[0].mxu0
  %v302 = vadd.f32 %v84, %v301
  %v303 = vpop.f32.mrb[0].mxu0
  %v304 = vpop.f32.mrb[0].mxu0
  %v305 = vadd.f32 %v84, %v304
  %v306 = vpop.f32.mrb[0].mxu0
  %307 = vdwg.mxu0
  %v308 = vmax.f32 %v182, 0.0
  %v309 = vmax.f32 %v185, 0.0
  %v310 = vmax.f32 %v190, 0.0
  %v311 = vmax.f32 %v193, 0.0
  %v312 = vmax.f32 %v198, 0.0
  %v313 = vmax.f32 %v201, 0.0
  %v314 = vmax.f32 %v206, 0.0
  %v315 = vmax.f32 %v209, 0.0
  %v316 = vmax.f32 %v214, 0.0
  %v317 = vmax.f32 %v217, 0.0
  %v318 = vmax.f32 %v222, 0.0
  %v319 = vmax.f32 %v225, 0.0
  %v320 = vmax.f32 %v230, 0.0
  %v321 = vmax.f32 %v233, 0.0
  %v322 = vmax.f32 %v238, 0.0
  %v323 = vmax.f32 %v241, 0.0
  %v324 = vmax.f32 %v246, 0.0
  %v325 = vmax.f32 %v249, 0.0
  %v326 = vmax.f32 %v254, 0.0
  %v327 = vmax.f32 %v257, 0.0
  %v328 = vmax.f32 %v262, 0.0
  %v329 = vmax.f32 %v265, 0.0
  %v330 = vmax.f32 %v270, 0.0
  %v331 = vmax.f32 %v273, 0.0
  %v332 = vmax.f32 %v278, 0.0
  %v333 = vmax.f32 %v281, 0.0
  %v334 = vmax.f32 %v286, 0.0
  %v335 = vmax.f32 %v289, 0.0
  %v336 = vmax.f32 %v294, 0.0
  %v337 = vmax.f32 %v297, 0.0
  %v338 = vmax.f32 %v302, 0.0
  %v339 = vmax.f32 %v305, 0.0
  %v340 = vpack.c.bf16 %v309, %v308
  %v341 = vpack.c.bf16 %v311, %v310
  %v342 = vpack.c.bf16 %v313, %v312
  %v343 = vpack.c.bf16 %v315, %v314
  %v344 = vpack.c.bf16 %v317, %v316
  %v345 = vpack.c.bf16 %v319, %v318
  %v346 = vpack.c.bf16 %v321, %v320
  %v347 = vpack.c.bf16 %v323, %v322
  %v348 = vpack.c.bf16 %v325, %v324
  %v349 = vpack.c.bf16 %v327, %v326
  %v350 = vpack.c.bf16 %v329, %v328
  %v351 = vpack.c.bf16 %v331, %v330
  %v352 = vpack.c.bf16 %v333, %v332
  %v353 = vpack.c.bf16 %v335, %v334
  %v354 = vpack.c.bf16 %v337, %v336
  %v355 = vpack.c.bf16 %v339, %v338
  %v356 = vld [vmem:[%s3] sm:$0xf]
  %v357 = vld [vmem:[%s3 + $0x4] sm:$0xf]
  %v358 = vld [vmem:[%s3 + $0x8] sm:$0xf]
  %v359 = vld [vmem:[%s3 + $0xc] sm:$0xf]
  %v360 = vld [vmem:[%s3 + $0x10] sm:$0xf]
  %v361 = vld [vmem:[%s3 + $0x14] sm:$0xf]
  %v362 = vld [vmem:[%s3 + $0x18] sm:$0xf]
  %v363 = vld [vmem:[%s3 + $0x1c] sm:$0xf]
  %v364 = vld [vmem:[%s3 + $0x20] sm:$0xf]
  %v365 = vld [vmem:[%s3 + $0x24] sm:$0xf]
  %v366 = vld [vmem:[%s3 + $0x28] sm:$0xf]
  %v367 = vld [vmem:[%s3 + $0x2c] sm:$0xf]
  %v368 = vld [vmem:[%s3 + $0x30] sm:$0xf]
  %v369 = vld [vmem:[%s3 + $0x34] sm:$0xf]
  %v370 = vld [vmem:[%s3 + $0x38] sm:$0xf]
  %v371 = vld [vmem:[%s3 + $0x3c] sm:$0xf]
  %v372 = vld [vmem:[%s4] sm:$0x1]
  %v374 = vlaneseq
  %v375 = vshrl.u32 %v374, 7
  %v376 = vsub.s32 0, %v375
  %v377 = vrot.slane %v372, %v376
  %v395 = vunpack.c.l.b16 %v356
  %v396 = vunpack.c.l.b16 %v357
  %v397 = vunpack.c.l.b16 %v358
  %v398 = vunpack.c.l.b16 %v359
  %v399 = vunpack.c.l.b16 %v360
  %v400 = vunpack.c.l.b16 %v361
  %v401 = vunpack.c.l.b16 %v362
  %v402 = vunpack.c.l.b16 %v363
  %v403 = vunpack.c.l.b16 %v364
  %v404 = vunpack.c.l.b16 %v365
  %v405 = vunpack.c.l.b16 %v366
  %v406 = vunpack.c.l.b16 %v367
  %v407 = vunpack.c.l.b16 %v368
  %v408 = vunpack.c.l.b16 %v369
  %v409 = vunpack.c.l.b16 %v370
  %v410 = vunpack.c.l.b16 %v371
  %v411 = vpack.c.b16 %v396, %v395
  %v412 = vpack.c.b16 %v398, %v397
  %v413 = vpack.c.b16 %v400, %v399
  %v414 = vpack.c.b16 %v402, %v401
  %v415 = vpack.c.b16 %v404, %v403
  %v416 = vpack.c.b16 %v406, %v405
  %v417 = vpack.c.b16 %v408, %v407
  %v418 = vpack.c.b16 %v410, %v409
  %427 = vmatprep.subr.bf16.mxu0 0
  %428 = vmatpush1.bf16.msra.mxu0 %v411
  %429 = vmatprep.subr.bf16.mxu0 0
  %430 = vmatpush1.bf16.msra.mxu0 %v412
  %431 = vmatprep.subr.bf16.mxu0 0
  %432 = vmatpush1.bf16.msra.mxu0 %v413
  %433 = vmatprep.subr.bf16.mxu0 0
  %434 = vmatpush1.bf16.msra.mxu0 %v414
  %435 = vmatprep.subr.bf16.mxu0 0
  %436 = vmatpush1.bf16.msra.mxu0 %v415
  %437 = vmatprep.subr.bf16.mxu0 0
  %438 = vmatpush1.bf16.msra.mxu0 %v416
  %439 = vmatprep.subr.bf16.mxu0 0
  %440 = vmatpush1.bf16.msra.mxu0 %v417
  %441 = vmatprep.subr.bf16.mxu0 0
  %442 = vmatpush1.bf16.msra.mxu0 %v418
  %443 = vmatprep.subr.bf16.mxu0 0
  %444 = vmatpush1.bf16.msra.mxu0 0
  %445 = vmatprep.subr.bf16.mxu0 0
  %446 = vmatpush1.bf16.msra.mxu0 0
  %447 = vmatprep.subr.bf16.mxu0 0
  %448 = vmatpush1.bf16.msra.mxu0 0
  %449 = vmatprep.subr.bf16.mxu0 0
  %450 = vmatpush1.bf16.msra.mxu0 0
  %451 = vmatprep.subr.bf16.mxu0 0
  %452 = vmatpush1.bf16.msra.mxu0 0
  %453 = vmatprep.subr.bf16.mxu0 0
  %454 = vmatpush1.bf16.msra.mxu0 0
  %455 = vmatprep.subr.bf16.mxu0 0
  %456 = vmatpush1.bf16.msra.mxu0 0
  %457 = vmatprep.subr.bf16.mxu0 0
  %458 = vmatpush1.bf16.msra.mxu0 0
  %459 = vmatprep.mubr.bf16.mxu0 0
  %460 = vmatmul.mubr.bf16.gmra.mrb[0].mxu0 %v340
  %v461 = vpop.f32.mrb[0].mxu0
  %v462 = vadd.f32 %v377, %v461
  %v463 = vpop.f32.mrb[0].mxu0
  %v464 = vpop.f32.mrb[0].mxu0
  %v465 = vadd.f32 %v377, %v464
  %v466 = vpop.f32.mrb[0].mxu0
  %467 = vmatprep.mubr.bf16.mxu0 0
  %468 = vmatmul.mubr.bf16.gmra.mrb[0].mxu0 %v341
  %v469 = vpop.f32.mrb[0].mxu0
  %v470 = vadd.f32 %v377, %v469
  %v471 = vpop.f32.mrb[0].mxu0
  %v472 = vpop.f32.mrb[0].mxu0
  %v473 = vadd.f32 %v377, %v472
  %v474 = vpop.f32.mrb[0].mxu0
  %475 = vmatprep.mubr.bf16.mxu0 0
  %476 = vmatmul.mubr.bf16.gmra.mrb[0].mxu0 %v342
  %v477 = vpop.f32.mrb[0].mxu0
  %v478 = vadd.f32 %v377, %v477
  %v479 = vpop.f32.mrb[0].mxu0
  %v480 = vpop.f32.mrb[0].mxu0
  %v481 = vadd.f32 %v377, %v480
  %v482 = vpop.f32.mrb[0].mxu0
  %483 = vmatprep.mubr.bf16.mxu0 0
  %484 = vmatmul.mubr.bf16.gmra.mrb[0].mxu0 %v343
  %v485 = vpop.f32.mrb[0].mxu0
  %v486 = vadd.f32 %v377, %v485
  %v487 = vpop.f32.mrb[0].mxu0
  %v488 = vpop.f32.mrb[0].mxu0
  %v489 = vadd.f32 %v377, %v488
  %v490 = vpop.f32.mrb[0].mxu0
  %491 = vmatprep.mubr.bf16.mxu0 0
  %492 = vmatmul.mubr.bf16.gmra.mrb[0].mxu0 %v344
  %v493 = vpop.f32.mrb[0].mxu0
  %v494 = vadd.f32 %v377, %v493
  %v495 = vpop.f32.mrb[0].mxu0
  %v496 = vpop.f32.mrb[0].mxu0
  %v497 = vadd.f32 %v377, %v496
  %v498 = vpop.f32.mrb[0].mxu0
  %499 = vmatprep.mubr.bf16.mxu0 0
  %500 = vmatmul.mubr.bf16.gmra.mrb[0].mxu0 %v345
  %v501 = vpop.f32.mrb[0].mxu0
  %v502 = vadd.f32 %v377, %v501
  %v503 = vpop.f32.mrb[0].mxu0
  %v504 = vpop.f32.mrb[0].mxu0
  %v505 = vadd.f32 %v377, %v504
  %v506 = vpop.f32.mrb[0].mxu0
  %507 = vmatprep.mubr.bf16.mxu0 0
  %508 = vmatmul.mubr.bf16.gmra.mrb[0].mxu0 %v346
  %v509 = vpop.f32.mrb[0].mxu0
  %v510 = vadd.f32 %v377, %v509
  %v511 = vpop.f32.mrb[0].mxu0
  %v512 = vpop.f32.mrb[0].mxu0
  %v513 = vadd.f32 %v377, %v512
  %v514 = vpop.f32.mrb[0].mxu0
  %515 = vmatprep.mubr.bf16.mxu0 0
  %516 = vmatmul.mubr.bf16.gmra.mrb[0].mxu0 %v347
  %v517 = vpop.f32.mrb[0].mxu0
  %v518 = vadd.f32 %v377, %v517
  %v519 = vpop.f32.mrb[0].mxu0
  %v520 = vpop.f32.mrb[0].mxu0
  %v521 = vadd.f32 %v377, %v520
  %v522 = vpop.f32.mrb[0].mxu0
  %523 = vmatprep.mubr.bf16.mxu0 0
  %524 = vmatmul.mubr.bf16.gmra.mrb[0].mxu0 %v348
  %v525 = vpop.f32.mrb[0].mxu0
  %v526 = vadd.f32 %v377, %v525
  %v527 = vpop.f32.mrb[0].mxu0
  %v528 = vpop.f32.mrb[0].mxu0
  %v529 = vadd.f32 %v377, %v528
  %v530 = vpop.f32.mrb[0].mxu0
  %531 = vmatprep.mubr.bf16.mxu0 0
  %532 = vmatmul.mubr.bf16.gmra.mrb[0].mxu0 %v349
  %v533 = vpop.f32.mrb[0].mxu0
  %v534 = vadd.f32 %v377, %v533
  %v535 = vpop.f32.mrb[0].mxu0
  %v536 = vpop.f32.mrb[0].mxu0
  %v537 = vadd.f32 %v377, %v536
  %v538 = vpop.f32.mrb[0].mxu0
  %539 = vmatprep.mubr.bf16.mxu0 0
  %540 = vmatmul.mubr.bf16.gmra.mrb[0].mxu0 %v350
  %v541 = vpop.f32.mrb[0].mxu0
  %v542 = vadd.f32 %v377, %v541
  %v543 = vpop.f32.mrb[0].mxu0
  %v544 = vpop.f32.mrb[0].mxu0
  %v545 = vadd.f32 %v377, %v544
  %v546 = vpop.f32.mrb[0].mxu0
  %547 = vmatprep.mubr.bf16.mxu0 0
  %548 = vmatmul.mubr.bf16.gmra.mrb[0].mxu0 %v351
  %v549 = vpop.f32.mrb[0].mxu0
  %v550 = vadd.f32 %v377, %v549
  %v551 = vpop.f32.mrb[0].mxu0
  %v552 = vpop.f32.mrb[0].mxu0
  %v553 = vadd.f32 %v377, %v552
  %v554 = vpop.f32.mrb[0].mxu0
  %555 = vmatprep.mubr.bf16.mxu0 0
  %556 = vmatmul.mubr.bf16.gmra.mrb[0].mxu0 %v352
  %v557 = vpop.f32.mrb[0].mxu0
  %v558 = vadd.f32 %v377, %v557
  %v559 = vpop.f32.mrb[0].mxu0
  %v560 = vpop.f32.mrb[0].mxu0
  %v561 = vadd.f32 %v377, %v560
  %v562 = vpop.f32.mrb[0].mxu0
  %563 = vmatprep.mubr.bf16.mxu0 0
  %564 = vmatmul.mubr.bf16.gmra.mrb[0].mxu0 %v353
  %v565 = vpop.f32.mrb[0].mxu0
  %v566 = vadd.f32 %v377, %v565
  %v567 = vpop.f32.mrb[0].mxu0
  %v568 = vpop.f32.mrb[0].mxu0
  %v569 = vadd.f32 %v377, %v568
  %v570 = vpop.f32.mrb[0].mxu0
  %571 = vmatprep.mubr.bf16.mxu0 0
  %572 = vmatmul.mubr.bf16.gmra.mrb[0].mxu0 %v354
  %v573 = vpop.f32.mrb[0].mxu0
  %v574 = vadd.f32 %v377, %v573
  %v575 = vpop.f32.mrb[0].mxu0
  %v576 = vpop.f32.mrb[0].mxu0
  %v577 = vadd.f32 %v377, %v576
  %v578 = vpop.f32.mrb[0].mxu0
  %579 = vmatprep.mubr.bf16.mxu0 0
  %580 = vmatmul.mubr.bf16.gmra.mrb[0].mxu0 %v355
  %v581 = vpop.f32.mrb[0].mxu0
  %v582 = vadd.f32 %v377, %v581
  %v583 = vpop.f32.mrb[0].mxu0
  %v584 = vpop.f32.mrb[0].mxu0
  %v585 = vadd.f32 %v377, %v584
  %v586 = vpop.f32.mrb[0].mxu0
  %587 = vdwg.mxu0
  %v588 = vmax.f32 %v462, 0.0
  %v589 = vmax.f32 %v465, 0.0
  %v590 = vmax.f32 %v470, 0.0
  %v591 = vmax.f32 %v473, 0.0
  %v592 = vmax.f32 %v478, 0.0
  %v593 = vmax.f32 %v481, 0.0
  %v594 = vmax.f32 %v486, 0.0
  %v595 = vmax.f32 %v489, 0.0
  %v596 = vmax.f32 %v494, 0.0
  %v597 = vmax.f32 %v497, 0.0
  %v598 = vmax.f32 %v502, 0.0
  %v599 = vmax.f32 %v505, 0.0
  %v600 = vmax.f32 %v510, 0.0
  %v601 = vmax.f32 %v513, 0.0
  %v602 = vmax.f32 %v518, 0.0
  %v603 = vmax.f32 %v521, 0.0
  %v604 = vmax.f32 %v526, 0.0
  %v605 = vmax.f32 %v529, 0.0
  %v606 = vmax.f32 %v534, 0.0
  %v607 = vmax.f32 %v537, 0.0
  %v608 = vmax.f32 %v542, 0.0
  %v609 = vmax.f32 %v545, 0.0
  %v610 = vmax.f32 %v550, 0.0
  %v611 = vmax.f32 %v553, 0.0
  %v612 = vmax.f32 %v558, 0.0
  %v613 = vmax.f32 %v561, 0.0
  %v614 = vmax.f32 %v566, 0.0
  %v615 = vmax.f32 %v569, 0.0
  %v616 = vmax.f32 %v574, 0.0
  %v617 = vmax.f32 %v577, 0.0
  %v618 = vmax.f32 %v582, 0.0
  %v619 = vmax.f32 %v585, 0.0
  %v620 = vpack.c.bf16 %v589, %v588
  %v621 = vpack.c.bf16 %v591, %v590
  %v622 = vpack.c.bf16 %v593, %v592
  %v623 = vpack.c.bf16 %v595, %v594
  %v624 = vpack.c.bf16 %v597, %v596
  %v625 = vpack.c.bf16 %v599, %v598
  %v626 = vpack.c.bf16 %v601, %v600
  %v627 = vpack.c.bf16 %v603, %v602
  %v628 = vpack.c.bf16 %v605, %v604
  %v629 = vpack.c.bf16 %v607, %v606
  %v630 = vpack.c.bf16 %v609, %v608
  %v631 = vpack.c.bf16 %v611, %v610
  %v632 = vpack.c.bf16 %v613, %v612
  %v633 = vpack.c.bf16 %v615, %v614
  %v634 = vpack.c.bf16 %v617, %v616
  %v635 = vpack.c.bf16 %v619, %v618
  %v636 = vld [vmem:[%s5] sm:$0xf]
  %v637 = vld [vmem:[%s5 + $0x4] sm:$0xf]
  %v638 = vld [vmem:[%s5 + $0x8] sm:$0xf]
  %v639 = vld [vmem:[%s5 + $0xc] sm:$0xf]
  %v640 = vld [vmem:[%s5 + $0x10] sm:$0xf]
  %v641 = vld [vmem:[%s5 + $0x14] sm:$0xf]
  %v642 = vld [vmem:[%s5 + $0x18] sm:$0xf]
  %v643 = vld [vmem:[%s5 + $0x1c] sm:$0xf]
  %v644 = vld [vmem:[%s5 + $0x20] sm:$0xf]
  %v645 = vld [vmem:[%s5 + $0x24] sm:$0xf]
  %v646 = vld [vmem:[%s5 + $0x28] sm:$0xf]
  %v647 = vld [vmem:[%s5 + $0x2c] sm:$0xf]
  %v648 = vld [vmem:[%s5 + $0x30] sm:$0xf]
  %v649 = vld [vmem:[%s5 + $0x34] sm:$0xf]
  %v650 = vld [vmem:[%s5 + $0x38] sm:$0xf]
  %v651 = vld [vmem:[%s5 + $0x3c] sm:$0xf]
  %v652 = vld [vmem:[%s6] sm:$0x1]
  %v654 = vlaneseq
  %v655 = vshrl.u32 %v654, 7
  %v656 = vsub.s32 0, %v655
  %v657 = vrot.slane %v652, %v656
  %v675 = vunpack.c.l.b16 %v636
  %v676 = vunpack.c.l.b16 %v637
  %v677 = vunpack.c.l.b16 %v638
  %v678 = vunpack.c.l.b16 %v639
  %v679 = vunpack.c.l.b16 %v640
  %v680 = vunpack.c.l.b16 %v641
  %v681 = vunpack.c.l.b16 %v642
  %v682 = vunpack.c.l.b16 %v643
  %v683 = vunpack.c.l.b16 %v644
  %v684 = vunpack.c.l.b16 %v645
  %v685 = vunpack.c.l.b16 %v646
  %v686 = vunpack.c.l.b16 %v647
  %v687 = vunpack.c.l.b16 %v648
  %v688 = vunpack.c.l.b16 %v649
  %v689 = vunpack.c.l.b16 %v650
  %v690 = vunpack.c.l.b16 %v651
  %v691 = vpack.c.b16 %v676, %v675
  %v692 = vpack.c.b16 %v678, %v677
  %v693 = vpack.c.b16 %v680, %v679
  %v694 = vpack.c.b16 %v682, %v681
  %v695 = vpack.c.b16 %v684, %v683
  %v696 = vpack.c.b16 %v686, %v685
  %v697 = vpack.c.b16 %v688, %v687
  %v698 = vpack.c.b16 %v690, %v689
  %707 = vmatprep.subr.bf16.mxu0 0
  %708 = vmatpush1.bf16.msra.mxu0 %v691
  %709 = vmatprep.subr.bf16.mxu0 0
  %710 = vmatpush1.bf16.msra.mxu0 %v692
  %711 = vmatprep.subr.bf16.mxu0 0
  %712 = vmatpush1.bf16.msra.mxu0 %v693
  %713 = vmatprep.subr.bf16.mxu0 0
  %714 = vmatpush1.bf16.msra.mxu0 %v694
  %715 = vmatprep.subr.bf16.mxu0 0
  %716 = vmatpush1.bf16.msra.mxu0 %v695
  %717 = vmatprep.subr.bf16.mxu0 0
  %718 = vmatpush1.bf16.msra.mxu0 %v696
  %719 = vmatprep.subr.bf16.mxu0 0
  %720 = vmatpush1.bf16.msra.mxu0 %v697
  %721 = vmatprep.subr.bf16.mxu0 0
  %722 = vmatpush1.bf16.msra.mxu0 %v698
  %723 = vmatprep.subr.bf16.mxu0 0
  %724 = vmatpush1.bf16.msra.mxu0 0
  %725 = vmatprep.subr.bf16.mxu0 0
  %726 = vmatpush1.bf16.msra.mxu0 0
  %727 = vmatprep.subr.bf16.mxu0 0
  %728 = vmatpush1.bf16.msra.mxu0 0
  %729 = vmatprep.subr.bf16.mxu0 0
  %730 = vmatpush1.bf16.msra.mxu0 0
  %731 = vmatprep.subr.bf16.mxu0 0
  %732 = vmatpush1.bf16.msra.mxu0 0
  %733 = vmatprep.subr.bf16.mxu0 0
  %734 = vmatpush1.bf16.msra.mxu0 0
  %735 = vmatprep.subr.bf16.mxu0 0
  %736 = vmatpush1.bf16.msra.mxu0 0
  %737 = vmatprep.subr.bf16.mxu0 0
  %738 = vmatpush1.bf16.msra.mxu0 0
  %739 = vmatprep.mubr.bf16.mxu0 0
  %740 = vmatmul.mubr.bf16.gmra.mrb[0].mxu0 %v620
  %v741 = vpop.f32.mrb[0].mxu0
  %v742 = vadd.f32 %v657, %v741
  %v743 = vpop.f32.mrb[0].mxu0
  %v744 = vpop.f32.mrb[0].mxu0
  %v745 = vadd.f32 %v657, %v744
  %v746 = vpop.f32.mrb[0].mxu0
  %747 = vmatprep.mubr.bf16.mxu0 0
  %748 = vmatmul.mubr.bf16.gmra.mrb[0].mxu0 %v621
  %v749 = vpop.f32.mrb[0].mxu0
  %v750 = vadd.f32 %v657, %v749
  %v751 = vpop.f32.mrb[0].mxu0
  %v752 = vpop.f32.mrb[0].mxu0
  %v753 = vadd.f32 %v657, %v752
  %v754 = vpop.f32.mrb[0].mxu0
  %755 = vmatprep.mubr.bf16.mxu0 0
  %756 = vmatmul.mubr.bf16.gmra.mrb[0].mxu0 %v622
  %v757 = vpop.f32.mrb[0].mxu0
  %v758 = vadd.f32 %v657, %v757
  %v759 = vpop.f32.mrb[0].mxu0
  %v760 = vpop.f32.mrb[0].mxu0
  %v761 = vadd.f32 %v657, %v760
  %v762 = vpop.f32.mrb[0].mxu0
  %763 = vmatprep.mubr.bf16.mxu0 0
  %764 = vmatmul.mubr.bf16.gmra.mrb[0].mxu0 %v623
  %v765 = vpop.f32.mrb[0].mxu0
  %v766 = vadd.f32 %v657, %v765
  %v767 = vpop.f32.mrb[0].mxu0
  %v768 = vpop.f32.mrb[0].mxu0
  %v769 = vadd.f32 %v657, %v768
  %v770 = vpop.f32.mrb[0].mxu0
  %771 = vmatprep.mubr.bf16.mxu0 0
  %772 = vmatmul.mubr.bf16.gmra.mrb[0].mxu0 %v624
  %v773 = vpop.f32.mrb[0].mxu0
  %v774 = vadd.f32 %v657, %v773
  %v775 = vpop.f32.mrb[0].mxu0
  %v776 = vpop.f32.mrb[0].mxu0
  %v777 = vadd.f32 %v657, %v776
  %v778 = vpop.f32.mrb[0].mxu0
  %779 = vmatprep.mubr.bf16.mxu0 0
  %780 = vmatmul.mubr.bf16.gmra.mrb[0].mxu0 %v625
  %v781 = vpop.f32.mrb[0].mxu0
  %v782 = vadd.f32 %v657, %v781
  %v783 = vpop.f32.mrb[0].mxu0
  %v784 = vpop.f32.mrb[0].mxu0
  %v785 = vadd.f32 %v657, %v784
  %v786 = vpop.f32.mrb[0].mxu0
  %787 = vmatprep.mubr.bf16.mxu0 0
  %788 = vmatmul.mubr.bf16.gmra.mrb[0].mxu0 %v626
  %v789 = vpop.f32.mrb[0].mxu0
  %v790 = vadd.f32 %v657, %v789
  %v791 = vpop.f32.mrb[0].mxu0
  %v792 = vpop.f32.mrb[0].mxu0
  %v793 = vadd.f32 %v657, %v792
  %v794 = vpop.f32.mrb[0].mxu0
  %795 = vmatprep.mubr.bf16.mxu0 0
  %796 = vmatmul.mubr.bf16.gmra.mrb[0].mxu0 %v627
  %v797 = vpop.f32.mrb[0].mxu0
  %v798 = vadd.f32 %v657, %v797
  %v799 = vpop.f32.mrb[0].mxu0
  %v800 = vpop.f32.mrb[0].mxu0
  %v801 = vadd.f32 %v657, %v800
  %v802 = vpop.f32.mrb[0].mxu0
  %803 = vmatprep.mubr.bf16.mxu0 0
  %804 = vmatmul.mubr.bf16.gmra.mrb[0].mxu0 %v628
  %v805 = vpop.f32.mrb[0].mxu0
  %v806 = vadd.f32 %v657, %v805
  %v807 = vpop.f32.mrb[0].mxu0
  %v808 = vpop.f32.mrb[0].mxu0
  %v809 = vadd.f32 %v657, %v808
  %v810 = vpop.f32.mrb[0].mxu0
  %811 = vmatprep.mubr.bf16.mxu0 0
  %812 = vmatmul.mubr.bf16.gmra.mrb[0].mxu0 %v629
  %v813 = vpop.f32.mrb[0].mxu0
  %v814 = vadd.f32 %v657, %v813
  %v815 = vpop.f32.mrb[0].mxu0
  %v816 = vpop.f32.mrb[0].mxu0
  %v817 = vadd.f32 %v657, %v816
  %v818 = vpop.f32.mrb[0].mxu0
  %819 = vmatprep.mubr.bf16.mxu0 0
  %820 = vmatmul.mubr.bf16.gmra.mrb[0].mxu0 %v630
  %v821 = vpop.f32.mrb[0].mxu0
  %v822 = vadd.f32 %v657, %v821
  %v823 = vpop.f32.mrb[0].mxu0
  %v824 = vpop.f32.mrb[0].mxu0
  %v825 = vadd.f32 %v657, %v824
  %v826 = vpop.f32.mrb[0].mxu0
  %827 = vmatprep.mubr.bf16.mxu0 0
  %828 = vmatmul.mubr.bf16.gmra.mrb[0].mxu0 %v631
  %v829 = vpop.f32.mrb[0].mxu0
  %v830 = vadd.f32 %v657, %v829
  %v831 = vpop.f32.mrb[0].mxu0
  %v832 = vpop.f32.mrb[0].mxu0
  %v833 = vadd.f32 %v657, %v832
  %v834 = vpop.f32.mrb[0].mxu0
  %835 = vmatprep.mubr.bf16.mxu0 0
  %836 = vmatmul.mubr.bf16.gmra.mrb[0].mxu0 %v632
  %v837 = vpop.f32.mrb[0].mxu0
  %v838 = vadd.f32 %v657, %v837
  %v839 = vpop.f32.mrb[0].mxu0
  %v840 = vpop.f32.mrb[0].mxu0
  %v841 = vadd.f32 %v657, %v840
  %v842 = vpop.f32.mrb[0].mxu0
  %843 = vmatprep.mubr.bf16.mxu0 0
  %844 = vmatmul.mubr.bf16.gmra.mrb[0].mxu0 %v633
  %v845 = vpop.f32.mrb[0].mxu0
  %v846 = vadd.f32 %v657, %v845
  %v847 = vpop.f32.mrb[0].mxu0
  %v848 = vpop.f32.mrb[0].mxu0
  %v849 = vadd.f32 %v657, %v848
  %v850 = vpop.f32.mrb[0].mxu0
  %851 = vmatprep.mubr.bf16.mxu0 0
  %852 = vmatmul.mubr.bf16.gmra.mrb[0].mxu0 %v634
  %v853 = vpop.f32.mrb[0].mxu0
  %v854 = vadd.f32 %v657, %v853
  %v855 = vpop.f32.mrb[0].mxu0
  %v856 = vpop.f32.mrb[0].mxu0
  %v857 = vadd.f32 %v657, %v856
  %v858 = vpop.f32.mrb[0].mxu0
  %859 = vmatprep.mubr.bf16.mxu0 0
  %860 = vmatmul.mubr.bf16.gmra.mrb[0].mxu0 %v635
  %v861 = vpop.f32.mrb[0].mxu0
  %v862 = vadd.f32 %v657, %v861
  %v863 = vpop.f32.mrb[0].mxu0
  %v864 = vpop.f32.mrb[0].mxu0
  %v865 = vadd.f32 %v657, %v864
  %v866 = vpop.f32.mrb[0].mxu0
  %867 = vdwg.mxu0
  %vm868 = vcmask 130048
  %869 = vst.msk [vmem:[%s7] sm:$0xff] %vm868, %v742
  %870 = vst.msk [vmem:[%s7 + $0x8] sm:$0xff] %vm868, %v745
  %871 = vst.msk [vmem:[%s7 + $0x10] sm:$0xff] %vm868, %v750
  %872 = vst.msk [vmem:[%s7 + $0x18] sm:$0xff] %vm868, %v753
  %873 = vst.msk [vmem:[%s7 + $0x20] sm:$0xff] %vm868, %v758
  %874 = vst.msk [vmem:[%s7 + $0x28] sm:$0xff] %vm868, %v761
  %875 = vst.msk [vmem:[%s7 + $0x30] sm:$0xff] %vm868, %v766
  %876 = vst.msk [vmem:[%s7 + $0x38] sm:$0xff] %vm868, %v769
  %877 = vst.msk [vmem:[%s7 + $0x40] sm:$0xff] %vm868, %v774
  %878 = vst.msk [vmem:[%s7 + $0x48] sm:$0xff] %vm868, %v777
  %879 = vst.msk [vmem:[%s7 + $0x50] sm:$0xff] %vm868, %v782
  %880 = vst.msk [vmem:[%s7 + $0x58] sm:$0xff] %vm868, %v785
  %881 = vst.msk [vmem:[%s7 + $0x60] sm:$0xff] %vm868, %v790
  %882 = vst.msk [vmem:[%s7 + $0x68] sm:$0xff] %vm868, %v793
  %883 = vst.msk [vmem:[%s7 + $0x70] sm:$0xff] %vm868, %v798
  %884 = vst.msk [vmem:[%s7 + $0x78] sm:$0xff] %vm868, %v801
  %885 = vst.msk [vmem:[%s7 + $0x80] sm:$0xff] %vm868, %v806
  %886 = vst.msk [vmem:[%s7 + $0x88] sm:$0xff] %vm868, %v809
  %887 = vst.msk [vmem:[%s7 + $0x90] sm:$0xff] %vm868, %v814
  %888 = vst.msk [vmem:[%s7 + $0x98] sm:$0xff] %vm868, %v817
  %889 = vst.msk [vmem:[%s7 + $0xa0] sm:$0xff] %vm868, %v822
  %890 = vst.msk [vmem:[%s7 + $0xa8] sm:$0xff] %vm868, %v825
  %891 = vst.msk [vmem:[%s7 + $0xb0] sm:$0xff] %vm868, %v830
  %892 = vst.msk [vmem:[%s7 + $0xb8] sm:$0xff] %vm868, %v833
  %893 = vst.msk [vmem:[%s7 + $0xc0] sm:$0xff] %vm868, %v838
  %894 = vst.msk [vmem:[%s7 + $0xc8] sm:$0xff] %vm868, %v841
  %895 = vst.msk [vmem:[%s7 + $0xd0] sm:$0xff] %vm868, %v846
  %896 = vst.msk [vmem:[%s7 + $0xd8] sm:$0xff] %vm868, %v849
  %897 = vst.msk [vmem:[%s7 + $0xe0] sm:$0xff] %vm868, %v854
  %898 = vst.msk [vmem:[%s7 + $0xe8] sm:$0xff] %vm868, %v857
  %899 = vst.msk [vmem:[%s7 + $0xf0] sm:$0xff] %vm868, %v862
  %900 = vst.msk [vmem:[%s7 + $0xf8] sm:$0xff] %vm868, %v865
  // Predicated region
  $region30: #{tpu_custom_call.1} parent=0 // pred_check
    _
  $region31: #{tpu_custom_call.1} parent=0 // pred_check_branch
    %902 = sbr.rel (0) target = $region33
  $region32: #{tpu_custom_call.1} parent=0 // pred_region
    _
  $region33: #{tpu_custom_call.1} parent=0 // pred_fallthru
    _
  // Predicated region
  $region34: #{tpu_custom_call.1} parent=0 // pred_check
    _
  $region35: #{tpu_custom_call.1} parent=0 // pred_check_branch
    %904 = sbr.rel (0) target = $region37
  $region36: #{tpu_custom_call.1} parent=0 // pred_region
    _
  $region37: #{tpu_custom_call.1} parent=0 // pred_fallthru
    _

</llo_original>
